<compile_context>
chip_gen: v6e
topology: v6e:2x2x1
jax: 0.10.0
libtpu: 0.0.40
codegen_flags: <defaults>
</compile_context>

<pallas_src>
import jax
import jax.numpy as jnp
from jax.experimental import pallas as pl
from jax.experimental.pallas import tpu as pltpu


# ----------------------------- Pallas kernels ------------------------------ #

def _conv_relu_pool_kernel(taps_ref, w_ref, b_ref, o_ref):
    """Fused conv (4 pool-parity matmuls) + 2x2 max-pool + bias + ReLU.

    taps_ref: (4, K, M)   K = C_in*k*k patch features, M = B*Hp*Wp pooled pixels
    w_ref:    (C_out, K)  PyTorch (C_out, C_in, k, k) reshaped
    b_ref:    (C_out, 1)
    o_ref:    (C_out, M)  channel-major, lane-dense output
    """
    w = w_ref[...]
    m = jnp.dot(w, taps_ref[0], preferred_element_type=jnp.float32)
    for t in range(1, 4):
        m = jnp.maximum(
            m, jnp.dot(w, taps_ref[t], preferred_element_type=jnp.float32))
    o_ref[...] = jnp.maximum(m + b_ref[...], 0.0).astype(o_ref.dtype)


def conv_relu_pool(taps, w, b):
    """taps (4,K,M) f32, w (C_out,K), b (C_out,1) -> (C_out,M) pooled activations."""
    _, K, M = taps.shape
    c_out = w.shape[0]
    return pl.pallas_call(
        _conv_relu_pool_kernel,
        out_shape=jax.ShapeDtypeStruct((c_out, M), jnp.float32),
        grid_spec=pltpu.PrefetchScalarGridSpec(
            num_scalar_prefetch=0,
            grid=(1,),
            in_specs=[
                pl.BlockSpec((4, K, M), lambda i: (0, 0, 0)),
                pl.BlockSpec((c_out, K), lambda i: (0, 0)),
                pl.BlockSpec((c_out, 1), lambda i: (0, 0)),
            ],
            out_specs=pl.BlockSpec((c_out, M), lambda i: (0, 0)),
        ),
        compiler_params=pltpu.CompilerParams(
            dimension_semantics=("arbitrary",)),
    )(taps, w, b)


def _mlp_kernel(x_ref, w1_ref, b1_ref, w2_ref, b2_ref, w3_ref, b3_ref, o_ref):
    h = jnp.dot(x_ref[...], w1_ref[...], preferred_element_type=jnp.float32)
    h = jnp.maximum(h + b1_ref[...], 0.0)
    h = jnp.dot(h, w2_ref[...], preferred_element_type=jnp.float32)
    h = jnp.maximum(h + b2_ref[...], 0.0)
    o = jnp.dot(h, w3_ref[...], preferred_element_type=jnp.float32)
    o_ref[...] = (o + b3_ref[...]).astype(o_ref.dtype)


def mlp_head(feats, w1, b1, w2, b2, w3, b3):
    """Fused fc1(relu)->fc2(relu)->fc3 with all widths padded to 128."""
    B, K = feats.shape
    N1, N2, N3 = w1.shape[1], w2.shape[1], w3.shape[1]
    return pl.pallas_call(
        _mlp_kernel,
        out_shape=jax.ShapeDtypeStruct((B, N3), jnp.float32),
        grid_spec=pltpu.PrefetchScalarGridSpec(
            num_scalar_prefetch=0,
            grid=(1,),
            in_specs=[
                pl.BlockSpec((B, K), lambda i: (0, 0)),
                pl.BlockSpec((K, N1), lambda i: (0, 0)),
                pl.BlockSpec((1, N1), lambda i: (0, 0)),
                pl.BlockSpec((N1, N2), lambda i: (0, 0)),
                pl.BlockSpec((1, N2), lambda i: (0, 0)),
                pl.BlockSpec((N2, N3), lambda i: (0, 0)),
                pl.BlockSpec((1, N3), lambda i: (0, 0)),
            ],
            out_specs=pl.BlockSpec((B, N3), lambda i: (0, 0)),
        ),
        compiler_params=pltpu.CompilerParams(
            dimension_semantics=("arbitrary",)),
    )(feats, w1, b1, w2, b2, w3, b3)


# ------------------------------- glue (JAX) -------------------------------- #

def _pooled_conv_taps(x_cbhw, k):
    """x (C,B,H,W) -> (4, C*k*k, B*Hp*Wp) pool-parity im2col matrices.

    Row order (c, kh, kw) matches PyTorch (C_out, C_in, k, k).reshape(C_out, -1);
    column order (b, i, j) over POOLED output coordinates (Hp=(H-k+1)//2).
    Tap t=(p,q) holds the patches of conv output position (2i+p, 2j+q).
    """
    C, B, H, W = x_cbhw.shape
    Hp, Wp = (H - k + 1) // 2, (W - k + 1) // 2
    taps = []
    for p in range(2):
        for q in range(2):
            slabs = []
            for kh in range(k):
                for kw in range(k):
                    r0, c0 = p + kh, q + kw
                    slabs.append(
                        x_cbhw[:, :, r0:r0 + 2 * Hp - 1:2, c0:c0 + 2 * Wp - 1:2])
            t = jnp.stack(slabs, axis=1)          # (C, k*k, B, Hp, Wp)
            taps.append(t.reshape(C * k * k, B * Hp * Wp))
    return jnp.stack(taps, axis=0)                # (4, C*k*k, B*Hp*Wp)


def init_params(key):
    def uinit(k, shape, fan_in):
        bound = 1.0 / float(fan_in) ** 0.5
        return jax.random.uniform(k, shape, jnp.float32, -bound, bound)

    ks = jax.random.split(key, 10)
    return {
        "conv1_w": uinit(ks[0], (6, 3, 5, 5), 3 * 25),
        "conv1_b": uinit(ks[1], (6,), 3 * 25),
        "conv2_w": uinit(ks[2], (16, 6, 5, 5), 6 * 25),
        "conv2_b": uinit(ks[3], (16,), 6 * 25),
        "fc1_w": uinit(ks[4], (120, 400), 400),
        "fc1_b": uinit(ks[5], (120,), 400),
        "fc2_w": uinit(ks[6], (84, 120), 120),
        "fc2_b": uinit(ks[7], (84,), 120),
        "fc3_w": uinit(ks[8], (10, 84), 84),
        "fc3_b": uinit(ks[9], (10,), 84),
    }


def net_forward(params, x_nchw):
    B = x_nchw.shape[0]
    f32 = jnp.float32

    # --- kernel-ready parameter views (tiny; folded by XLA) ---
    w1 = params["conv1_w"].reshape(6, 75)        # contraction order (c, kh, kw)
    b1 = params["conv1_b"].reshape(6, 1)
    w2 = params["conv2_w"].reshape(16, 150)
    b2 = params["conv2_b"].reshape(16, 1)
    # MLP weights transposed + zero-padded to lane-friendly widths (->128).
    fc1_w = jnp.zeros((400, 128), f32).at[:, :120].set(params["fc1_w"].T)
    fc1_b = jnp.zeros((1, 128), f32).at[:, :120].set(params["fc1_b"])
    fc2_w = jnp.zeros((128, 128), f32).at[:120, :84].set(params["fc2_w"].T)
    fc2_b = jnp.zeros((1, 128), f32).at[:, :84].set(params["fc2_b"])
    fc3_w = jnp.zeros((128, 128), f32).at[:84, :10].set(params["fc3_w"].T)
    fc3_b = jnp.zeros((1, 128), f32).at[:, :10].set(params["fc3_b"])

    # --- stage 1: conv1 + ReLU + 2x2 pool (one fused kernel) ---
    x = jnp.transpose(x_nchw, (1, 0, 2, 3))       # channel-major (3, B, 32, 32)
    taps1 = _pooled_conv_taps(x, 5)               # (4, 75, B*14*14)
    p1 = conv_relu_pool(taps1, w1, b1)            # (6, B*196)

    # --- stage 2: conv2 + ReLU + 2x2 pool (one fused kernel) ---
    p1 = p1.reshape(6, B, 14, 14)                 # still channel-major
    taps2 = _pooled_conv_taps(p1, 5)              # (4, 150, B*25)
    p2 = conv_relu_pool(taps2, w2, b2)            # (16, B*25)

    # flatten to PyTorch NCHW order (b, c, h, w); tiny (B*400 floats) transpose
    feats = jnp.transpose(p2.reshape(16, B, 25), (1, 0, 2)).reshape(B, 400)

    logits = mlp_head(feats, fc1_w, fc1_b, fc2_w, fc2_b, fc3_w, fc3_b)  # (B,128)
    return logits[:, :10]


def net_forward_ref(params, x_nchw):
    """Pure-JAX reference matching the PyTorch module."""
    y = jax.lax.conv_general_dilated(
        x_nchw, params["conv1_w"], (1, 1), "VALID",
        dimension_numbers=("NCHW", "OIHW", "NCHW"))
    y = jax.nn.relu(y + params["conv1_b"][None, :, None, None])
    y = jax.lax.reduce_window(y, -jnp.inf, jax.lax.max,
                              (1, 1, 2, 2), (1, 1, 2, 2), "VALID")
    y = jax.lax.conv_general_dilated(
        y, params["conv2_w"], (1, 1), "VALID",
        dimension_numbers=("NCHW", "OIHW", "NCHW"))
    y = jax.nn.relu(y + params["conv2_b"][None, :, None, None])
    y = jax.lax.reduce_window(y, -jnp.inf, jax.lax.max,
                              (1, 1, 2, 2), (1, 1, 2, 2), "VALID")
    y = y.reshape(y.shape[0], -1)
    y = jax.nn.relu(y @ params["fc1_w"].T + params["fc1_b"])
    y = jax.nn.relu(y @ params["fc2_w"].T + params["fc2_b"])
    return y @ params["fc3_w"].T + params["fc3_b"]


if __name__ == "__main__":
    key = jax.random.PRNGKey(0)
    pkey, xkey = jax.random.split(key)
    params = init_params(pkey)
    x = jax.random.normal(xkey, (2, 3, 32, 32), jnp.float32)  # NCHW, like PyTorch

    out = jax.block_until_ready(jax.jit(net_forward)(params, x))
    assert out.shape == (2, 10) and out.dtype == jnp.float32

    ref = jax.block_until_ready(jax.jit(net_forward_ref)(params, x))
    assert jnp.allclose(out, ref, atol=2e-3, rtol=2e-3), "mismatch vs JAX reference"

    print("KERNEL_OK")
</pallas_src>

<mosaic_0001>
module attributes {stable_mosaic.version = 11 : i64} {
  func.func @_conv_relu_pool_kernel(%arg0: i32, %arg1: memref<4x75x392xf32, #tpu.memory_space<vmem>>, %arg2: memref<6x75xf32, #tpu.memory_space<vmem>>, %arg3: memref<6x1xf32, #tpu.memory_space<vmem>>, %arg4: memref<6x392xf32, #tpu.memory_space<vmem>>) attributes {dimension_semantics = [#tpu.dimension_semantics<arbitrary>], iteration_bounds = array<i64: 1>, scalar_prefetch = 0 : i64, scratch_operands = 0 : i64, tpu.core_type = #tpu.core_type<tc>, window_params = [{pipeline_mode = #tpu.pipeline_mode<synchronous>, transform_indices = @transform_0, window_bounds = array<i64: 4, 75, 392>}, {pipeline_mode = #tpu.pipeline_mode<synchronous>, transform_indices = @transform_1, window_bounds = array<i64: 6, 75>}, {pipeline_mode = #tpu.pipeline_mode<synchronous>, transform_indices = @transform_2, window_bounds = array<i64: 6, 1>}, {pipeline_mode = #tpu.pipeline_mode<synchronous>, transform_indices = @transform_3, window_bounds = array<i64: 6, 392>}]} {
    %c0 = arith.constant 0 : index
    %c0_0 = arith.constant 0 : index
    %0 = vector.load %arg2[%c0, %c0_0] : memref<6x75xf32, #tpu.memory_space<vmem>>, vector<6x75xf32>
    %c0_1 = arith.constant 0 : index
    %c0_2 = arith.constant 0 : index
    %c0_3 = arith.constant 0 : index
    %1 = vector.load %arg1[%c0_1, %c0_2, %c0_3] : memref<4x75x392xf32, #tpu.memory_space<vmem>>, vector<1x75x392xf32>
    %2 = vector.shape_cast %1 : vector<1x75x392xf32> to vector<75x392xf32>
    %cst = arith.constant dense<0.000000e+00> : vector<6x392xf32>
    %3 = tpu.matmul %0, %2, %cst {dimension_numbers = #tpu.dot_dimension_numbers<[1], [0], [0], [1], [0, 0, 1, 1], [], []>} : vector<6x75xf32>, vector<75x392xf32>, vector<6x392xf32> -> vector<6x392xf32>
    %c1 = arith.constant 1 : index
    %c0_4 = arith.constant 0 : index
    %c0_5 = arith.constant 0 : index
    %4 = vector.load %arg1[%c1, %c0_4, %c0_5] : memref<4x75x392xf32, #tpu.memory_space<vmem>>, vector<1x75x392xf32>
    %5 = vector.shape_cast %4 : vector<1x75x392xf32> to vector<75x392xf32>
    %cst_6 = arith.constant dense<0.000000e+00> : vector<6x392xf32>
    %6 = tpu.matmul %0, %5, %cst_6 {dimension_numbers = #tpu.dot_dimension_numbers<[1], [0], [0], [1], [0, 0, 1, 1], [], []>} : vector<6x75xf32>, vector<75x392xf32>, vector<6x392xf32> -> vector<6x392xf32>
    %7 = arith.maximumf %3, %6 : vector<6x392xf32>
    %c2 = arith.constant 2 : index
    %c0_7 = arith.constant 0 : index
    %c0_8 = arith.constant 0 : index
    %8 = vector.load %arg1[%c2, %c0_7, %c0_8] : memref<4x75x392xf32, #tpu.memory_space<vmem>>, vector<1x75x392xf32>
    %9 = vector.shape_cast %8 : vector<1x75x392xf32> to vector<75x392xf32>
    %cst_9 = arith.constant dense<0.000000e+00> : vector<6x392xf32>
    %10 = tpu.matmul %0, %9, %cst_9 {dimension_numbers = #tpu.dot_dimension_numbers<[1], [0], [0], [1], [0, 0, 1, 1], [], []>} : vector<6x75xf32>, vector<75x392xf32>, vector<6x392xf32> -> vector<6x392xf32>
    %11 = arith.maximumf %7, %10 : vector<6x392xf32>
    %c3 = arith.constant 3 : index
    %c0_10 = arith.constant 0 : index
    %c0_11 = arith.constant 0 : index
    %12 = vector.load %arg1[%c3, %c0_10, %c0_11] : memref<4x75x392xf32, #tpu.memory_space<vmem>>, vector<1x75x392xf32>
    %13 = vector.shape_cast %12 : vector<1x75x392xf32> to vector<75x392xf32>
    %cst_12 = arith.constant dense<0.000000e+00> : vector<6x392xf32>
    %14 = tpu.matmul %0, %13, %cst_12 {dimension_numbers = #tpu.dot_dimension_numbers<[1], [0], [0], [1], [0, 0, 1, 1], [], []>} : vector<6x75xf32>, vector<75x392xf32>, vector<6x392xf32> -> vector<6x392xf32>
    %15 = arith.maximumf %11, %14 : vector<6x392xf32>
    %c0_13 = arith.constant 0 : index
    %c0_14 = arith.constant 0 : index
    %16 = vector.load %arg3[%c0_13, %c0_14] : memref<6x1xf32, #tpu.memory_space<vmem>>, vector<6x1xf32>
    %17 = vector.broadcast %16 : vector<6x1xf32> to vector<6x392xf32>
    %18 = arith.addf %15, %17 : vector<6x392xf32>
    %cst_15 = arith.constant 0.000000e+00 : f32
    %19 = vector.broadcast %cst_15 : f32 to vector<6x392xf32>
    %20 = arith.maximumf %18, %19 : vector<6x392xf32>
    %c0_16 = arith.constant 0 : index
    %c0_17 = arith.constant 0 : index
    %21 = vector.load %arg4[%c0_16, %c0_17] : memref<6x392xf32, #tpu.memory_space<vmem>>, vector<6x392xf32>
    tpu.vector_store %arg4[%c0_16, %c0_17], %20 {strides = array<i32>} : memref<6x392xf32, #tpu.memory_space<vmem>>, vector<6x392xf32>,
    return
  }
  func.func @transform_0(%arg0: i32) -> (i32, i32, i32) {
    %c0_i32 = arith.constant 0 : i32
    %c0_i32_0 = arith.constant 0 : i32
    %c0_i32_1 = arith.constant 0 : i32
    %c0_i32_2 = arith.constant 0 : i32
    return %c0_i32, %c0_i32_0, %c0_i32_1 : i32, i32, i32
  }
  func.func @transform_1(%arg0: i32) -> (i32, i32) {
    %c0_i32 = arith.constant 0 : i32
    %c0_i32_0 = arith.constant 0 : i32
    %c0_i32_1 = arith.constant 0 : i32
    return %c0_i32, %c0_i32_0 : i32, i32
  }
  func.func @transform_2(%arg0: i32) -> (i32, i32) {
    %c0_i32 = arith.constant 0 : i32
    %c0_i32_0 = arith.constant 0 : i32
    %c0_i32_1 = arith.constant 0 : i32
    return %c0_i32, %c0_i32_0 : i32, i32
  }
  func.func @transform_3(%arg0: i32) -> (i32, i32) {
    %c0_i32 = arith.constant 0 : i32
    %c0_i32_0 = arith.constant 0 : i32
    %c0_i32_1 = arith.constant 0 : i32
    return %c0_i32, %c0_i32_0 : i32, i32
  }
}

module attributes {stable_mosaic.version = 11 : i64} {
  func.func @_conv_relu_pool_kernel(%arg0: i32, %arg1: memref<4x150x50xf32, #tpu.memory_space<vmem>>, %arg2: memref<16x150xf32, #tpu.memory_space<vmem>>, %arg3: memref<16x1xf32, #tpu.memory_space<vmem>>, %arg4: memref<16x50xf32, #tpu.memory_space<vmem>>) attributes {dimension_semantics = [#tpu.dimension_semantics<arbitrary>], iteration_bounds = array<i64: 1>, scalar_prefetch = 0 : i64, scratch_operands = 0 : i64, tpu.core_type = #tpu.core_type<tc>, window_params = [{pipeline_mode = #tpu.pipeline_mode<synchronous>, transform_indices = @transform_0, window_bounds = array<i64: 4, 150, 50>}, {pipeline_mode = #tpu.pipeline_mode<synchronous>, transform_indices = @transform_1, window_bounds = array<i64: 16, 150>}, {pipeline_mode = #tpu.pipeline_mode<synchronous>, transform_indices = @transform_2, window_bounds = array<i64: 16, 1>}, {pipeline_mode = #tpu.pipeline_mode<synchronous>, transform_indices = @transform_3, window_bounds = array<i64: 16, 50>}]} {
    %c0 = arith.constant 0 : index
    %c0_0 = arith.constant 0 : index
    %0 = vector.load %arg2[%c0, %c0_0] : memref<16x150xf32, #tpu.memory_space<vmem>>, vector<16x150xf32>
    %c0_1 = arith.constant 0 : index
    %c0_2 = arith.constant 0 : index
    %c0_3 = arith.constant 0 : index
    %1 = vector.load %arg1[%c0_1, %c0_2, %c0_3] : memref<4x150x50xf32, #tpu.memory_space<vmem>>, vector<1x150x50xf32>
    %2 = vector.shape_cast %1 : vector<1x150x50xf32> to vector<150x50xf32>
    %cst = arith.constant dense<0.000000e+00> : vector<16x50xf32>
    %3 = tpu.matmul %0, %2, %cst {dimension_numbers = #tpu.dot_dimension_numbers<[1], [0], [0], [1], [0, 0, 1, 1], [], []>} : vector<16x150xf32>, vector<150x50xf32>, vector<16x50xf32> -> vector<16x50xf32>
    %c1 = arith.constant 1 : index
    %c0_4 = arith.constant 0 : index
    %c0_5 = arith.constant 0 : index
    %4 = vector.load %arg1[%c1, %c0_4, %c0_5] : memref<4x150x50xf32, #tpu.memory_space<vmem>>, vector<1x150x50xf32>
    %5 = vector.shape_cast %4 : vector<1x150x50xf32> to vector<150x50xf32>
    %cst_6 = arith.constant dense<0.000000e+00> : vector<16x50xf32>
    %6 = tpu.matmul %0, %5, %cst_6 {dimension_numbers = #tpu.dot_dimension_numbers<[1], [0], [0], [1], [0, 0, 1, 1], [], []>} : vector<16x150xf32>, vector<150x50xf32>, vector<16x50xf32> -> vector<16x50xf32>
    %7 = arith.maximumf %3, %6 : vector<16x50xf32>
    %c2 = arith.constant 2 : index
    %c0_7 = arith.constant 0 : index
    %c0_8 = arith.constant 0 : index
    %8 = vector.load %arg1[%c2, %c0_7, %c0_8] : memref<4x150x50xf32, #tpu.memory_space<vmem>>, vector<1x150x50xf32>
    %9 = vector.shape_cast %8 : vector<1x150x50xf32> to vector<150x50xf32>
    %cst_9 = arith.constant dense<0.000000e+00> : vector<16x50xf32>
    %10 = tpu.matmul %0, %9, %cst_9 {dimension_numbers = #tpu.dot_dimension_numbers<[1], [0], [0], [1], [0, 0, 1, 1], [], []>} : vector<16x150xf32>, vector<150x50xf32>, vector<16x50xf32> -> vector<16x50xf32>
    %11 = arith.maximumf %7, %10 : vector<16x50xf32>
    %c3 = arith.constant 3 : index
    %c0_10 = arith.constant 0 : index
    %c0_11 = arith.constant 0 : index
    %12 = vector.load %arg1[%c3, %c0_10, %c0_11] : memref<4x150x50xf32, #tpu.memory_space<vmem>>, vector<1x150x50xf32>
    %13 = vector.shape_cast %12 : vector<1x150x50xf32> to vector<150x50xf32>
    %cst_12 = arith.constant dense<0.000000e+00> : vector<16x50xf32>
    %14 = tpu.matmul %0, %13, %cst_12 {dimension_numbers = #tpu.dot_dimension_numbers<[1], [0], [0], [1], [0, 0, 1, 1], [], []>} : vector<16x150xf32>, vector<150x50xf32>, vector<16x50xf32> -> vector<16x50xf32>
    %15 = arith.maximumf %11, %14 : vector<16x50xf32>
    %c0_13 = arith.constant 0 : index
    %c0_14 = arith.constant 0 : index
    %16 = vector.load %arg3[%c0_13, %c0_14] : memref<16x1xf32, #tpu.memory_space<vmem>>, vector<16x1xf32>
    %17 = vector.broadcast %16 : vector<16x1xf32> to vector<16x50xf32>
    %18 = arith.addf %15, %17 : vector<16x50xf32>
    %cst_15 = arith.constant 0.000000e+00 : f32
    %19 = vector.broadcast %cst_15 : f32 to vector<16x50xf32>
    %20 = arith.maximumf %18, %19 : vector<16x50xf32>
    %c0_16 = arith.constant 0 : index
    %c0_17 = arith.constant 0 : index
    %21 = vector.load %arg4[%c0_16, %c0_17] : memref<16x50xf32, #tpu.memory_space<vmem>>, vector<16x50xf32>
    tpu.vector_store %arg4[%c0_16, %c0_17], %20 {strides = array<i32>} : memref<16x50xf32, #tpu.memory_space<vmem>>, vector<16x50xf32>,
    return
  }
  func.func @transform_0(%arg0: i32) -> (i32, i32, i32) {
    %c0_i32 = arith.constant 0 : i32
    %c0_i32_0 = arith.constant 0 : i32
    %c0_i32_1 = arith.constant 0 : i32
    %c0_i32_2 = arith.constant 0 : i32
    return %c0_i32, %c0_i32_0, %c0_i32_1 : i32, i32, i32
  }
  func.func @transform_1(%arg0: i32) -> (i32, i32) {
    %c0_i32 = arith.constant 0 : i32
    %c0_i32_0 = arith.constant 0 : i32
    %c0_i32_1 = arith.constant 0 : i32
    return %c0_i32, %c0_i32_0 : i32, i32
  }
  func.func @transform_2(%arg0: i32) -> (i32, i32) {
    %c0_i32 = arith.constant 0 : i32
    %c0_i32_0 = arith.constant 0 : i32
    %c0_i32_1 = arith.constant 0 : i32
    return %c0_i32, %c0_i32_0 : i32, i32
  }
  func.func @transform_3(%arg0: i32) -> (i32, i32) {
    %c0_i32 = arith.constant 0 : i32
    %c0_i32_0 = arith.constant 0 : i32
    %c0_i32_1 = arith.constant 0 : i32
    return %c0_i32, %c0_i32_0 : i32, i32
  }
}

module attributes {stable_mosaic.version = 11 : i64} {
  func.func @_mlp_kernel(%arg0: i32, %arg1: memref<2x400xf32, #tpu.memory_space<vmem>>, %arg2: memref<400x128xf32, #tpu.memory_space<vmem>>, %arg3: memref<1x128xf32, #tpu.memory_space<vmem>>, %arg4: memref<128x128xf32, #tpu.memory_space<vmem>>, %arg5: memref<1x128xf32, #tpu.memory_space<vmem>>, %arg6: memref<128x128xf32, #tpu.memory_space<vmem>>, %arg7: memref<1x128xf32, #tpu.memory_space<vmem>>, %arg8: memref<2x128xf32, #tpu.memory_space<vmem>>) attributes {dimension_semantics = [#tpu.dimension_semantics<arbitrary>], iteration_bounds = array<i64: 1>, scalar_prefetch = 0 : i64, scratch_operands = 0 : i64, tpu.core_type = #tpu.core_type<tc>, window_params = [{pipeline_mode = #tpu.pipeline_mode<synchronous>, transform_indices = @transform_0, window_bounds = array<i64: 2, 400>}, {pipeline_mode = #tpu.pipeline_mode<synchronous>, transform_indices = @transform_1, window_bounds = array<i64: 400, 128>}, {pipeline_mode = #tpu.pipeline_mode<synchronous>, transform_indices = @transform_2, window_bounds = array<i64: 1, 128>}, {pipeline_mode = #tpu.pipeline_mode<synchronous>, transform_indices = @transform_3, window_bounds = array<i64: 128, 128>}, {pipeline_mode = #tpu.pipeline_mode<synchronous>, transform_indices = @transform_4, window_bounds = array<i64: 1, 128>}, {pipeline_mode = #tpu.pipeline_mode<synchronous>, transform_indices = @transform_5, window_bounds = array<i64: 128, 128>}, {pipeline_mode = #tpu.pipeline_mode<synchronous>, transform_indices = @transform_6, window_bounds = array<i64: 1, 128>}, {pipeline_mode = #tpu.pipeline_mode<synchronous>, transform_indices = @transform_7, window_bounds = array<i64: 2, 128>}]} {
    %c0 = arith.constant 0 : index
    %c0_0 = arith.constant 0 : index
    %0 = vector.load %arg1[%c0, %c0_0] : memref<2x400xf32, #tpu.memory_space<vmem>>, vector<2x400xf32>
    %c0_1 = arith.constant 0 : index
    %c0_2 = arith.constant 0 : index
    %1 = vector.load %arg2[%c0_1, %c0_2] : memref<400x128xf32, #tpu.memory_space<vmem>>, vector<400x128xf32>
    %cst = arith.constant dense<0.000000e+00> : vector<2x128xf32>
    %2 = tpu.matmul %0, %1, %cst {dimension_numbers = #tpu.dot_dimension_numbers<[1], [0], [0], [1], [0, 0, 1, 1], [], []>} : vector<2x400xf32>, vector<400x128xf32>, vector<2x128xf32> -> vector<2x128xf32>
    %c0_3 = arith.constant 0 : index
    %c0_4 = arith.constant 0 : index
    %3 = vector.load %arg3[%c0_3, %c0_4] : memref<1x128xf32, #tpu.memory_space<vmem>>, vector<1x128xf32>
    %4 = vector.broadcast %3 : vector<1x128xf32> to vector<2x128xf32>
    %5 = arith.addf %2, %4 : vector<2x128xf32>
    %cst_5 = arith.constant 0.000000e+00 : f32
    %6 = vector.broadcast %cst_5 : f32 to vector<2x128xf32>
    %7 = arith.maximumf %5, %6 : vector<2x128xf32>
    %c0_6 = arith.constant 0 : index
    %c0_7 = arith.constant 0 : index
    %8 = vector.load %arg4[%c0_6, %c0_7] : memref<128x128xf32, #tpu.memory_space<vmem>>, vector<128x128xf32>
    %cst_8 = arith.constant dense<0.000000e+00> : vector<2x128xf32>
    %9 = tpu.matmul %7, %8, %cst_8 {dimension_numbers = #tpu.dot_dimension_numbers<[1], [0], [0], [1], [0, 0, 1, 1], [], []>} : vector<2x128xf32>, vector<128x128xf32>, vector<2x128xf32> -> vector<2x128xf32>
    %c0_9 = arith.constant 0 : index
    %c0_10 = arith.constant 0 : index
    %10 = vector.load %arg5[%c0_9, %c0_10] : memref<1x128xf32, #tpu.memory_space<vmem>>, vector<1x128xf32>
    %11 = vector.broadcast %10 : vector<1x128xf32> to vector<2x128xf32>
    %12 = arith.addf %9, %11 : vector<2x128xf32>
    %cst_11 = arith.constant 0.000000e+00 : f32
    %13 = vector.broadcast %cst_11 : f32 to vector<2x128xf32>
    %14 = arith.maximumf %12, %13 : vector<2x128xf32>
    %c0_12 = arith.constant 0 : index
    %c0_13 = arith.constant 0 : index
    %15 = vector.load %arg6[%c0_12, %c0_13] : memref<128x128xf32, #tpu.memory_space<vmem>>, vector<128x128xf32>
    %cst_14 = arith.constant dense<0.000000e+00> : vector<2x128xf32>
    %16 = tpu.matmul %14, %15, %cst_14 {dimension_numbers = #tpu.dot_dimension_numbers<[1], [0], [0], [1], [0, 0, 1, 1], [], []>} : vector<2x128xf32>, vector<128x128xf32>, vector<2x128xf32> -> vector<2x128xf32>
    %c0_15 = arith.constant 0 : index
    %c0_16 = arith.constant 0 : index
    %17 = vector.load %arg7[%c0_15, %c0_16] : memref<1x128xf32, #tpu.memory_space<vmem>>, vector<1x128xf32>
    %18 = vector.broadcast %17 : vector<1x128xf32> to vector<2x128xf32>
    %19 = arith.addf %16, %18 : vector<2x128xf32>
    %c0_17 = arith.constant 0 : index
    %c0_18 = arith.constant 0 : index
    %20 = vector.load %arg8[%c0_17, %c0_18] : memref<2x128xf32, #tpu.memory_space<vmem>>, vector<2x128xf32>
    tpu.vector_store %arg8[%c0_17, %c0_18], %19 {strides = array<i32>} : memref<2x128xf32, #tpu.memory_space<vmem>>, vector<2x128xf32>,
    return
  }
  func.func @transform_0(%arg0: i32) -> (i32, i32) {
    %c0_i32 = arith.constant 0 : i32
    %c0_i32_0 = arith.constant 0 : i32
    %c0_i32_1 = arith.constant 0 : i32
    return %c0_i32, %c0_i32_0 : i32, i32
  }
  func.func @transform_1(%arg0: i32) -> (i32, i32) {
    %c0_i32 = arith.constant 0 : i32
    %c0_i32_0 = arith.constant 0 : i32
    %c0_i32_1 = arith.constant 0 : i32
    return %c0_i32, %c0_i32_0 : i32, i32
  }
  func.func @transform_2(%arg0: i32) -> (i32, i32) {
    %c0_i32 = arith.constant 0 : i32
    %c0_i32_0 = arith.constant 0 : i32
    %c0_i32_1 = arith.constant 0 : i32
    return %c0_i32, %c0_i32_0 : i32, i32
  }
  func.func @transform_3(%arg0: i32) -> (i32, i32) {
    %c0_i32 = arith.constant 0 : i32
    %c0_i32_0 = arith.constant 0 : i32
    %c0_i32_1 = arith.constant 0 : i32
    return %c0_i32, %c0_i32_0 : i32, i32
  }
  func.func @transform_4(%arg0: i32) -> (i32, i32) {
    %c0_i32 = arith.constant 0 : i32
    %c0_i32_0 = arith.constant 0 : i32
    %c0_i32_1 = arith.constant 0 : i32
    return %c0_i32, %c0_i32_0 : i32, i32
  }
  func.func @transform_5(%arg0: i32) -> (i32, i32) {
    %c0_i32 = arith.constant 0 : i32
    %c0_i32_0 = arith.constant 0 : i32
    %c0_i32_1 = arith.constant 0 : i32
    return %c0_i32, %c0_i32_0 : i32, i32
  }
  func.func @transform_6(%arg0: i32) -> (i32, i32) {
    %c0_i32 = arith.constant 0 : i32
    %c0_i32_0 = arith.constant 0 : i32
    %c0_i32_1 = arith.constant 0 : i32
    return %c0_i32, %c0_i32_0 : i32, i32
  }
  func.func @transform_7(%arg0: i32) -> (i32, i32) {
    %c0_i32 = arith.constant 0 : i32
    %c0_i32_0 = arith.constant 0 : i32
    %c0_i32_1 = arith.constant 0 : i32
    return %c0_i32, %c0_i32_0 : i32, i32
  }
}

</mosaic_0001>

<llo_original>
// kernel: net_forward.3
$region0: #{net_forward.3}
  #allocation0 [shape = 'u32[]', space=smem, size = 0x4, offset = 0x4, fixed_abs, tag = 'smem constant byte address 0x4 - core index']
  #allocation1 [shape = 'u32[144,128]{1,0:T(1,128)}', space=vmem, size = 0x12000, scoped, tag = 'internal scratch']
  %s0 = inlined_call_operand.vmem [shape: f32[4,75,392], index: 0, kind: input, shape index: {}]
  %s1 = inlined_call_operand.vmem [shape: f32[6,75], index: 1, kind: input, shape index: {}]
  %s2 = inlined_call_operand.vmem [shape: f32[6,1], index: 2, kind: input, shape index: {}]
  %s3 = inlined_call_operand.vmem [shape: f32[6,392], index: 3, kind: output, shape index: {}]
  %s4 = sld [smem:[#allocation0]]
  $region22: #{net_forward.3} parent=0
    _
  %s6 = ssub.s32 1, %s4
  %s7 = scalar_select 0, %s6, %s4
  // Predicated region
  $region2: #{net_forward.3} parent=0 // pred_check
    _
  $region3: #{net_forward.3} parent=0 // pred_check_branch
    %9 = sbr.rel (0) target = $region5
  $region4: #{net_forward.3} parent=0 // pred_region
    _
  $region5: #{net_forward.3} parent=0 // pred_fallthru
    _
  // Predicated region
  $region6: #{net_forward.3} parent=0 // pred_check
    _
  $region7: #{net_forward.3} parent=0 // pred_check_branch
    %11 = sbr.rel (0) target = $region9
  $region8: #{net_forward.3} parent=0 // pred_region
    _
  $region9: #{net_forward.3} parent=0 // pred_fallthru
    _
  // Predicated region
  $region10: #{net_forward.3} parent=0 // pred_check
    _
  $region11: #{net_forward.3} parent=0 // pred_check_branch
    %13 = sbr.rel (0) target = $region13
  $region12: #{net_forward.3} parent=0 // pred_region
    _
  $region13: #{net_forward.3} parent=0 // pred_fallthru
    _
  %v14 = vld [vmem:[%s1] sm:$0x3f]
  %v15 = vld [vmem:[%s0] sm:$0xff]
  %v16 = vld [vmem:[%s0 + $0x8] sm:$0xff]
  %v17 = vld [vmem:[%s0 + $0x10] sm:$0xff]
  %v18 = vld [vmem:[%s0 + $0x18] sm:$0xff]
  %v19 = vld [vmem:[%s0 + $0x20] sm:$0xff]
  %v20 = vld [vmem:[%s0 + $0x28] sm:$0xff]
  %v21 = vld [vmem:[%s0 + $0x30] sm:$0xff]
  %v22 = vld [vmem:[%s0 + $0x38] sm:$0xff]
  %v23 = vld [vmem:[%s0 + $0x40] sm:$0xff]
  %v24 = vld [vmem:[%s0 + $0x48] sm:$0xff]
  %v25 = vld [vmem:[%s0 + $0x50] sm:$0xff]
  %v26 = vld [vmem:[%s0 + $0x58] sm:$0xff]
  %v27 = vld [vmem:[%s0 + $0x60] sm:$0xff]
  %v28 = vld [vmem:[%s0 + $0x68] sm:$0xff]
  %v29 = vld [vmem:[%s0 + $0x70] sm:$0xff]
  %v30 = vld [vmem:[%s0 + $0x78] sm:$0xff]
  %v31 = vld [vmem:[%s0 + $0x80] sm:$0xff]
  %v32 = vld [vmem:[%s0 + $0x88] sm:$0xff]
  %v33 = vld [vmem:[%s0 + $0x90] sm:$0xff]
  %v34 = vld [vmem:[%s0 + $0x98] sm:$0xff]
  %v35 = vld [vmem:[%s0 + $0xa0] sm:$0xff]
  %v36 = vld [vmem:[%s0 + $0xa8] sm:$0xff]
  %v37 = vld [vmem:[%s0 + $0xb0] sm:$0xff]
  %v38 = vld [vmem:[%s0 + $0xb8] sm:$0xff]
  %v39 = vld [vmem:[%s0 + $0xc0] sm:$0xff]
  %v40 = vld [vmem:[%s0 + $0xc8] sm:$0xff]
  %v41 = vld [vmem:[%s0 + $0xd0] sm:$0xff]
  %v42 = vld [vmem:[%s0 + $0xd8] sm:$0xff]
  %v43 = vld [vmem:[%s0 + $0xe0] sm:$0xff]
  %v44 = vld [vmem:[%s0 + $0xe8] sm:$0xff]
  %v45 = vld [vmem:[%s0 + $0xf0] sm:$0xff]
  %v46 = vld [vmem:[%s0 + $0xf8] sm:$0xff]
  %v47 = vld [vmem:[%s0 + $0x100] sm:$0xff]
  %v48 = vld [vmem:[%s0 + $0x108] sm:$0xff]
  %v49 = vld [vmem:[%s0 + $0x110] sm:$0xff]
  %v50 = vld [vmem:[%s0 + $0x118] sm:$0xff]
  %v51 = vld [vmem:[%s0 + $0x120] sm:$0x7]
  %v52 = vld [vmem:[%s0 + $0x128] sm:$0x7]
  %v53 = vld [vmem:[%s0 + $0x130] sm:$0x7]
  %v54 = vld [vmem:[%s0 + $0x138] sm:$0x7]
  %vm55 = vcmask 613376
  %v57 = vsel %vm55, %v14, 0
  %vm59 = vcmask 1042432
  %v61 = vsel %vm59, %v51, 0
  %v64 = vsel %vm59, %v52, 0
  %v67 = vsel %vm59, %v53, 0
  %v70 = vsel %vm59, %v54, 0
  %72 = vmatprep.subr.mxu0 0.0
  %73 = vmatpush1.msra.mxu0 0.0
  %74 = vmatprep.subr.mxu0 0.0
  %75 = vmatpush1.msra.mxu0 0.0
  %76 = vmatprep.subr.mxu0 0.0
  %77 = vmatpush1.msra.mxu0 0.0
  %78 = vmatprep.subr.mxu0 0.0
  %79 = vmatpush1.msra.mxu0 0.0
  %80 = vmatprep.subr.mxu0 0.0
  %81 = vmatpush1.msra.mxu0 0.0
  %82 = vmatprep.subr.mxu0 0.0
  %83 = vmatpush1.msra.mxu0 0.0
  %84 = vmatprep.subr.mxu0 %v64
  %85 = vmatpush1.msra.mxu0 %v61
  %86 = vmatprep.subr.mxu0 %v48
  %87 = vmatpush1.msra.mxu0 %v47
  %88 = vmatprep.subr.mxu0 %v44
  %89 = vmatpush1.msra.mxu0 %v43
  %90 = vmatprep.subr.mxu0 %v40
  %91 = vmatpush1.msra.mxu0 %v39
  %92 = vmatprep.subr.mxu0 %v36
  %93 = vmatpush1.msra.mxu0 %v35
  %94 = vmatprep.subr.mxu0 %v32
  %95 = vmatpush1.msra.mxu0 %v31
  %96 = vmatprep.subr.mxu0 %v28
  %97 = vmatpush1.msra.mxu0 %v27
  %98 = vmatprep.subr.mxu0 %v24
  %99 = vmatpush1.msra.mxu0 %v23
  %100 = vmatprep.subr.mxu0 %v20
  %101 = vmatpush1.msra.mxu0 %v19
  %102 = vmatprep.subr.mxu0 %v16
  %103 = vmatpush1.msra.mxu0 %v15
  %104 = vmatprep.subr.mxu0 0.0
  %105 = vmatpush2.msra.mxu0 0.0
  %106 = vmatprep.subr.mxu0 0.0
  %107 = vmatpush2.msra.mxu0 0.0
  %108 = vmatprep.subr.mxu0 0.0
  %109 = vmatpush2.msra.mxu0 0.0
  %110 = vmatprep.subr.mxu0 0.0
  %111 = vmatpush2.msra.mxu0 0.0
  %112 = vmatprep.subr.mxu0 0.0
  %113 = vmatpush2.msra.mxu0 0.0
  %114 = vmatprep.subr.mxu0 0.0
  %115 = vmatpush2.msra.mxu0 0.0
  %116 = vmatprep.subr.mxu0 0.0
  %117 = vmatpush2.msra.mxu0 0.0
  %118 = vmatprep.subr.mxu0 0.0
  %119 = vmatpush2.msra.mxu0 0.0
  %120 = vmatprep.subr.mxu0 0.0
  %121 = vmatpush2.msra.mxu0 0.0
  %122 = vmatprep.subr.mxu0 0.0
  %123 = vmatpush2.msra.mxu0 0.0
  %124 = vmatprep.subr.mxu0 0.0
  %125 = vmatpush2.msra.mxu0 0.0
  %126 = vmatprep.subr.mxu0 0.0
  %127 = vmatpush2.msra.mxu0 0.0
  %128 = vmatprep.subr.mxu0 0.0
  %129 = vmatpush2.msra.mxu0 0.0
  %130 = vmatprep.subr.mxu0 0.0
  %131 = vmatpush2.msra.mxu0 0.0
  %132 = vmatprep.subr.mxu0 0.0
  %133 = vmatpush2.msra.mxu0 0.0
  %134 = vmatprep.subr.mxu0 0.0
  %135 = vmatpush2.msra.mxu0 0.0
  %136 = vmatprep.mubr.f32.mxu0 0.0
  %137 = vmatmul.mubr.f32.gmra.mxu0 %v57
  %v138 = vpop.f32.mrf.mxu0
  %v139 = vadd.f32 0.0, %v138
  %v140 = vpop.f32.mrf.mxu0
  %v141 = vadd.f32 0.0, %v140
  %142 = vdwg.mxu0
  %143 = vmatprep.subr.mxu0 0.0
  %144 = vmatpush1.msra.mxu0 0.0
  %145 = vmatprep.subr.mxu0 0.0
  %146 = vmatpush1.msra.mxu0 0.0
  %147 = vmatprep.subr.mxu0 0.0
  %148 = vmatpush1.msra.mxu0 0.0
  %149 = vmatprep.subr.mxu0 0.0
  %150 = vmatpush1.msra.mxu0 0.0
  %151 = vmatprep.subr.mxu0 0.0
  %152 = vmatpush1.msra.mxu0 0.0
  %153 = vmatprep.subr.mxu0 0.0
  %154 = vmatpush1.msra.mxu0 0.0
  %155 = vmatprep.subr.mxu0 %v70
  %156 = vmatpush1.msra.mxu0 %v67
  %157 = vmatprep.subr.mxu0 %v50
  %158 = vmatpush1.msra.mxu0 %v49
  %159 = vmatprep.subr.mxu0 %v46
  %160 = vmatpush1.msra.mxu0 %v45
  %161 = vmatprep.subr.mxu0 %v42
  %162 = vmatpush1.msra.mxu0 %v41
  %163 = vmatprep.subr.mxu0 %v38
  %164 = vmatpush1.msra.mxu0 %v37
  %165 = vmatprep.subr.mxu0 %v34
  %166 = vmatpush1.msra.mxu0 %v33
  %167 = vmatprep.subr.mxu0 %v30
  %168 = vmatpush1.msra.mxu0 %v29
  %169 = vmatprep.subr.mxu0 %v26
  %170 = vmatpush1.msra.mxu0 %v25
  %171 = vmatprep.subr.mxu0 %v22
  %172 = vmatpush1.msra.mxu0 %v21
  %173 = vmatprep.subr.mxu0 %v18
  %174 = vmatpush1.msra.mxu0 %v17
  %175 = vmatprep.subr.mxu0 0.0
  %176 = vmatpush2.msra.mxu0 0.0
  %177 = vmatprep.subr.mxu0 0.0
  %178 = vmatpush2.msra.mxu0 0.0
  %179 = vmatprep.subr.mxu0 0.0
  %180 = vmatpush2.msra.mxu0 0.0
  %181 = vmatprep.subr.mxu0 0.0
  %182 = vmatpush2.msra.mxu0 0.0
  %183 = vmatprep.subr.mxu0 0.0
  %184 = vmatpush2.msra.mxu0 0.0
  %185 = vmatprep.subr.mxu0 0.0
  %186 = vmatpush2.msra.mxu0 0.0
  %187 = vmatprep.subr.mxu0 0.0
  %188 = vmatpush2.msra.mxu0 0.0
  %189 = vmatprep.subr.mxu0 0.0
  %190 = vmatpush2.msra.mxu0 0.0
  %191 = vmatprep.subr.mxu0 0.0
  %192 = vmatpush2.msra.mxu0 0.0
  %193 = vmatprep.subr.mxu0 0.0
  %194 = vmatpush2.msra.mxu0 0.0
  %195 = vmatprep.subr.mxu0 0.0
  %196 = vmatpush2.msra.mxu0 0.0
  %197 = vmatprep.subr.mxu0 0.0
  %198 = vmatpush2.msra.mxu0 0.0
  %199 = vmatprep.subr.mxu0 0.0
  %200 = vmatpush2.msra.mxu0 0.0
  %201 = vmatprep.subr.mxu0 0.0
  %202 = vmatpush2.msra.mxu0 0.0
  %203 = vmatprep.subr.mxu0 0.0
  %204 = vmatpush2.msra.mxu0 0.0
  %205 = vmatprep.subr.mxu0 0.0
  %206 = vmatpush2.msra.mxu0 0.0
  %207 = vmatprep.mubr.f32.mxu0 0.0
  %208 = vmatmul.mubr.f32.gmra.mxu0 %v57
  %v209 = vpop.f32.mrf.mxu0
  %v210 = vadd.f32 0.0, %v209
  %v211 = vpop.f32.mrf.mxu0
  %v212 = vadd.f32 0.0, %v211
  %213 = vdwg.mxu0
  %s214 = scalar_lea.vmem %s0, 320
  %v215 = vld [vmem:[%s214] sm:$0xff]
  %v216 = vld [vmem:[%s214 + $0x8] sm:$0xff]
  %v217 = vld [vmem:[%s214 + $0x10] sm:$0xff]
  %v218 = vld [vmem:[%s214 + $0x18] sm:$0xff]
  %v219 = vld [vmem:[%s214 + $0x20] sm:$0xff]
  %v220 = vld [vmem:[%s214 + $0x28] sm:$0xff]
  %v221 = vld [vmem:[%s214 + $0x30] sm:$0xff]
  %v222 = vld [vmem:[%s214 + $0x38] sm:$0xff]
  %v223 = vld [vmem:[%s214 + $0x40] sm:$0xff]
  %v224 = vld [vmem:[%s214 + $0x48] sm:$0xff]
  %v225 = vld [vmem:[%s214 + $0x50] sm:$0xff]
  %v226 = vld [vmem:[%s214 + $0x58] sm:$0xff]
  %v227 = vld [vmem:[%s214 + $0x60] sm:$0xff]
  %v228 = vld [vmem:[%s214 + $0x68] sm:$0xff]
  %v229 = vld [vmem:[%s214 + $0x70] sm:$0xff]
  %v230 = vld [vmem:[%s214 + $0x78] sm:$0xff]
  %v231 = vld [vmem:[%s214 + $0x80] sm:$0xff]
  %v232 = vld [vmem:[%s214 + $0x88] sm:$0xff]
  %v233 = vld [vmem:[%s214 + $0x90] sm:$0xff]
  %v234 = vld [vmem:[%s214 + $0x98] sm:$0xff]
  %v235 = vld [vmem:[%s214 + $0xa0] sm:$0xff]
  %v236 = vld [vmem:[%s214 + $0xa8] sm:$0xff]
  %v237 = vld [vmem:[%s214 + $0xb0] sm:$0xff]
  %v238 = vld [vmem:[%s214 + $0xb8] sm:$0xff]
  %v239 = vld [vmem:[%s214 + $0xc0] sm:$0xff]
  %v240 = vld [vmem:[%s214 + $0xc8] sm:$0xff]
  %v241 = vld [vmem:[%s214 + $0xd0] sm:$0xff]
  %v242 = vld [vmem:[%s214 + $0xd8] sm:$0xff]
  %v243 = vld [vmem:[%s214 + $0xe0] sm:$0xff]
  %v244 = vld [vmem:[%s214 + $0xe8] sm:$0xff]
  %v245 = vld [vmem:[%s214 + $0xf0] sm:$0xff]
  %v246 = vld [vmem:[%s214 + $0xf8] sm:$0xff]
  %v247 = vld [vmem:[%s214 + $0x100] sm:$0xff]
  %v248 = vld [vmem:[%s214 + $0x108] sm:$0xff]
  %v249 = vld [vmem:[%s214 + $0x110] sm:$0xff]
  %v250 = vld [vmem:[%s214 + $0x118] sm:$0xff]
  %v251 = vld [vmem:[%s214 + $0x120] sm:$0x7]
  %v252 = vld [vmem:[%s214 + $0x128] sm:$0x7]
  %v253 = vld [vmem:[%s214 + $0x130] sm:$0x7]
  %v254 = vld [vmem:[%s214 + $0x138] sm:$0x7]
  %v256 = vsel %vm59, %v251, 0
  %v259 = vsel %vm59, %v252, 0
  %v262 = vsel %vm59, %v253, 0
  %v265 = vsel %vm59, %v254, 0
  %267 = vmatprep.subr.mxu0 0.0
  %268 = vmatpush1.msra.mxu0 0.0
  %269 = vmatprep.subr.mxu0 0.0
  %270 = vmatpush1.msra.mxu0 0.0
  %271 = vmatprep.subr.mxu0 0.0
  %272 = vmatpush1.msra.mxu0 0.0
  %273 = vmatprep.subr.mxu0 0.0
  %274 = vmatpush1.msra.mxu0 0.0
  %275 = vmatprep.subr.mxu0 0.0
  %276 = vmatpush1.msra.mxu0 0.0
  %277 = vmatprep.subr.mxu0 0.0
  %278 = vmatpush1.msra.mxu0 0.0
  %279 = vmatprep.subr.mxu0 %v259
  %280 = vmatpush1.msra.mxu0 %v256
  %281 = vmatprep.subr.mxu0 %v248
  %282 = vmatpush1.msra.mxu0 %v247
  %283 = vmatprep.subr.mxu0 %v244
  %284 = vmatpush1.msra.mxu0 %v243
  %285 = vmatprep.subr.mxu0 %v240
  %286 = vmatpush1.msra.mxu0 %v239
  %287 = vmatprep.subr.mxu0 %v236
  %288 = vmatpush1.msra.mxu0 %v235
  %289 = vmatprep.subr.mxu0 %v232
  %290 = vmatpush1.msra.mxu0 %v231
  %291 = vmatprep.subr.mxu0 %v228
  %292 = vmatpush1.msra.mxu0 %v227
  %293 = vmatprep.subr.mxu0 %v224
  %294 = vmatpush1.msra.mxu0 %v223
  %295 = vmatprep.subr.mxu0 %v220
  %296 = vmatpush1.msra.mxu0 %v219
  %297 = vmatprep.subr.mxu0 %v216
  %298 = vmatpush1.msra.mxu0 %v215
  %299 = vmatprep.subr.mxu0 0.0
  %300 = vmatpush2.msra.mxu0 0.0
  %301 = vmatprep.subr.mxu0 0.0
  %302 = vmatpush2.msra.mxu0 0.0
  %303 = vmatprep.subr.mxu0 0.0
  %304 = vmatpush2.msra.mxu0 0.0
  %305 = vmatprep.subr.mxu0 0.0
  %306 = vmatpush2.msra.mxu0 0.0
  %307 = vmatprep.subr.mxu0 0.0
  %308 = vmatpush2.msra.mxu0 0.0
  %309 = vmatprep.subr.mxu0 0.0
  %310 = vmatpush2.msra.mxu0 0.0
  %311 = vmatprep.subr.mxu0 0.0
  %312 = vmatpush2.msra.mxu0 0.0
  %313 = vmatprep.subr.mxu0 0.0
  %314 = vmatpush2.msra.mxu0 0.0
  %315 = vmatprep.subr.mxu0 0.0
  %316 = vmatpush2.msra.mxu0 0.0
  %317 = vmatprep.subr.mxu0 0.0
  %318 = vmatpush2.msra.mxu0 0.0
  %319 = vmatprep.subr.mxu0 0.0
  %320 = vmatpush2.msra.mxu0 0.0
  %321 = vmatprep.subr.mxu0 0.0
  %322 = vmatpush2.msra.mxu0 0.0
  %323 = vmatprep.subr.mxu0 0.0
  %324 = vmatpush2.msra.mxu0 0.0
  %325 = vmatprep.subr.mxu0 0.0
  %326 = vmatpush2.msra.mxu0 0.0
  %327 = vmatprep.subr.mxu0 0.0
  %328 = vmatpush2.msra.mxu0 0.0
  %329 = vmatprep.subr.mxu0 0.0
  %330 = vmatpush2.msra.mxu0 0.0
  %331 = vmatprep.mubr.f32.mxu0 0.0
  %332 = vmatmul.mubr.f32.gmra.mxu0 %v57
  %v333 = vpop.f32.mrf.mxu0
  %v334 = vadd.f32 0.0, %v333
  %v335 = vpop.f32.mrf.mxu0
  %v336 = vadd.f32 0.0, %v335
  %337 = vdwg.mxu0
  %338 = vmatprep.subr.mxu0 0.0
  %339 = vmatpush1.msra.mxu0 0.0
  %340 = vmatprep.subr.mxu0 0.0
  %341 = vmatpush1.msra.mxu0 0.0
  %342 = vmatprep.subr.mxu0 0.0
  %343 = vmatpush1.msra.mxu0 0.0
  %344 = vmatprep.subr.mxu0 0.0
  %345 = vmatpush1.msra.mxu0 0.0
  %346 = vmatprep.subr.mxu0 0.0
  %347 = vmatpush1.msra.mxu0 0.0
  %348 = vmatprep.subr.mxu0 0.0
  %349 = vmatpush1.msra.mxu0 0.0
  %350 = vmatprep.subr.mxu0 %v265
  %351 = vmatpush1.msra.mxu0 %v262
  %352 = vmatprep.subr.mxu0 %v250
  %353 = vmatpush1.msra.mxu0 %v249
  %354 = vmatprep.subr.mxu0 %v246
  %355 = vmatpush1.msra.mxu0 %v245
  %356 = vmatprep.subr.mxu0 %v242
  %357 = vmatpush1.msra.mxu0 %v241
  %358 = vmatprep.subr.mxu0 %v238
  %359 = vmatpush1.msra.mxu0 %v237
  %360 = vmatprep.subr.mxu0 %v234
  %361 = vmatpush1.msra.mxu0 %v233
  %362 = vmatprep.subr.mxu0 %v230
  %363 = vmatpush1.msra.mxu0 %v229
  %364 = vmatprep.subr.mxu0 %v226
  %365 = vmatpush1.msra.mxu0 %v225
  %366 = vmatprep.subr.mxu0 %v222
  %367 = vmatpush1.msra.mxu0 %v221
  %368 = vmatprep.subr.mxu0 %v218
  %369 = vmatpush1.msra.mxu0 %v217
  %370 = vmatprep.subr.mxu0 0.0
  %371 = vmatpush2.msra.mxu0 0.0
  %372 = vmatprep.subr.mxu0 0.0
  %373 = vmatpush2.msra.mxu0 0.0
  %374 = vmatprep.subr.mxu0 0.0
  %375 = vmatpush2.msra.mxu0 0.0
  %376 = vmatprep.subr.mxu0 0.0
  %377 = vmatpush2.msra.mxu0 0.0
  %378 = vmatprep.subr.mxu0 0.0
  %379 = vmatpush2.msra.mxu0 0.0
  %380 = vmatprep.subr.mxu0 0.0
  %381 = vmatpush2.msra.mxu0 0.0
  %382 = vmatprep.subr.mxu0 0.0
  %383 = vmatpush2.msra.mxu0 0.0
  %384 = vmatprep.subr.mxu0 0.0
  %385 = vmatpush2.msra.mxu0 0.0
  %386 = vmatprep.subr.mxu0 0.0
  %387 = vmatpush2.msra.mxu0 0.0
  %388 = vmatprep.subr.mxu0 0.0
  %389 = vmatpush2.msra.mxu0 0.0
  %390 = vmatprep.subr.mxu0 0.0
  %391 = vmatpush2.msra.mxu0 0.0
  %392 = vmatprep.subr.mxu0 0.0
  %393 = vmatpush2.msra.mxu0 0.0
  %394 = vmatprep.subr.mxu0 0.0
  %395 = vmatpush2.msra.mxu0 0.0
  %396 = vmatprep.subr.mxu0 0.0
  %397 = vmatpush2.msra.mxu0 0.0
  %398 = vmatprep.subr.mxu0 0.0
  %399 = vmatpush2.msra.mxu0 0.0
  %400 = vmatprep.subr.mxu0 0.0
  %401 = vmatpush2.msra.mxu0 0.0
  %402 = vmatprep.mubr.f32.mxu0 0.0
  %403 = vmatmul.mubr.f32.gmra.mxu0 %v57
  %v404 = vpop.f32.mrf.mxu0
  %v405 = vadd.f32 0.0, %v404
  %v406 = vpop.f32.mrf.mxu0
  %v407 = vadd.f32 0.0, %v406
  %408 = vdwg.mxu0
  %v409 = vmax.f32 %v139, %v334
  %v410 = vmax.f32 %v141, %v336
  %v411 = vmax.f32 %v210, %v405
  %v412 = vmax.f32 %v212, %v407
  %s413 = scalar_lea.vmem %s0, 640
  %v414 = vld [vmem:[%s413] sm:$0xff]
  %v415 = vld [vmem:[%s413 + $0x8] sm:$0xff]
  %v416 = vld [vmem:[%s413 + $0x10] sm:$0xff]
  %v417 = vld [vmem:[%s413 + $0x18] sm:$0xff]
  %v418 = vld [vmem:[%s413 + $0x20] sm:$0xff]
  %v419 = vld [vmem:[%s413 + $0x28] sm:$0xff]
  %v420 = vld [vmem:[%s413 + $0x30] sm:$0xff]
  %v421 = vld [vmem:[%s413 + $0x38] sm:$0xff]
  %v422 = vld [vmem:[%s413 + $0x40] sm:$0xff]
  %v423 = vld [vmem:[%s413 + $0x48] sm:$0xff]
  %v424 = vld [vmem:[%s413 + $0x50] sm:$0xff]
  %v425 = vld [vmem:[%s413 + $0x58] sm:$0xff]
  %v426 = vld [vmem:[%s413 + $0x60] sm:$0xff]
  %v427 = vld [vmem:[%s413 + $0x68] sm:$0xff]
  %v428 = vld [vmem:[%s413 + $0x70] sm:$0xff]
  %v429 = vld [vmem:[%s413 + $0x78] sm:$0xff]
  %v430 = vld [vmem:[%s413 + $0x80] sm:$0xff]
  %v431 = vld [vmem:[%s413 + $0x88] sm:$0xff]
  %v432 = vld [vmem:[%s413 + $0x90] sm:$0xff]
  %v433 = vld [vmem:[%s413 + $0x98] sm:$0xff]
  %v434 = vld [vmem:[%s413 + $0xa0] sm:$0xff]
  %v435 = vld [vmem:[%s413 + $0xa8] sm:$0xff]
  %v436 = vld [vmem:[%s413 + $0xb0] sm:$0xff]
  %v437 = vld [vmem:[%s413 + $0xb8] sm:$0xff]
  %v438 = vld [vmem:[%s413 + $0xc0] sm:$0xff]
  %v439 = vld [vmem:[%s413 + $0xc8] sm:$0xff]
  %v440 = vld [vmem:[%s413 + $0xd0] sm:$0xff]
  %v441 = vld [vmem:[%s413 + $0xd8] sm:$0xff]
  %v442 = vld [vmem:[%s413 + $0xe0] sm:$0xff]
  %v443 = vld [vmem:[%s413 + $0xe8] sm:$0xff]
  %v444 = vld [vmem:[%s413 + $0xf0] sm:$0xff]
  %v445 = vld [vmem:[%s413 + $0xf8] sm:$0xff]
  %v446 = vld [vmem:[%s413 + $0x100] sm:$0xff]
  %v447 = vld [vmem:[%s413 + $0x108] sm:$0xff]
  %v448 = vld [vmem:[%s413 + $0x110] sm:$0xff]
  %v449 = vld [vmem:[%s413 + $0x118] sm:$0xff]
  %v450 = vld [vmem:[%s413 + $0x120] sm:$0x7]
  %v451 = vld [vmem:[%s413 + $0x128] sm:$0x7]
  %v452 = vld [vmem:[%s413 + $0x130] sm:$0x7]
  %v453 = vld [vmem:[%s413 + $0x138] sm:$0x7]
  %v455 = vsel %vm59, %v450, 0
  %v458 = vsel %vm59, %v451, 0
  %v461 = vsel %vm59, %v452, 0
  %v464 = vsel %vm59, %v453, 0
  %466 = vmatprep.subr.mxu0 0.0
  %467 = vmatpush1.msra.mxu0 0.0
  %468 = vmatprep.subr.mxu0 0.0
  %469 = vmatpush1.msra.mxu0 0.0
  %470 = vmatprep.subr.mxu0 0.0
  %471 = vmatpush1.msra.mxu0 0.0
  %472 = vmatprep.subr.mxu0 0.0
  %473 = vmatpush1.msra.mxu0 0.0
  %474 = vmatprep.subr.mxu0 0.0
  %475 = vmatpush1.msra.mxu0 0.0
  %476 = vmatprep.subr.mxu0 0.0
  %477 = vmatpush1.msra.mxu0 0.0
  %478 = vmatprep.subr.mxu0 %v458
  %479 = vmatpush1.msra.mxu0 %v455
  %480 = vmatprep.subr.mxu0 %v447
  %481 = vmatpush1.msra.mxu0 %v446
  %482 = vmatprep.subr.mxu0 %v443
  %483 = vmatpush1.msra.mxu0 %v442
  %484 = vmatprep.subr.mxu0 %v439
  %485 = vmatpush1.msra.mxu0 %v438
  %486 = vmatprep.subr.mxu0 %v435
  %487 = vmatpush1.msra.mxu0 %v434
  %488 = vmatprep.subr.mxu0 %v431
  %489 = vmatpush1.msra.mxu0 %v430
  %490 = vmatprep.subr.mxu0 %v427
  %491 = vmatpush1.msra.mxu0 %v426
  %492 = vmatprep.subr.mxu0 %v423
  %493 = vmatpush1.msra.mxu0 %v422
  %494 = vmatprep.subr.mxu0 %v419
  %495 = vmatpush1.msra.mxu0 %v418
  %496 = vmatprep.subr.mxu0 %v415
  %497 = vmatpush1.msra.mxu0 %v414
  %498 = vmatprep.subr.mxu0 0.0
  %499 = vmatpush2.msra.mxu0 0.0
  %500 = vmatprep.subr.mxu0 0.0
  %501 = vmatpush2.msra.mxu0 0.0
  %502 = vmatprep.subr.mxu0 0.0
  %503 = vmatpush2.msra.mxu0 0.0
  %504 = vmatprep.subr.mxu0 0.0
  %505 = vmatpush2.msra.mxu0 0.0
  %506 = vmatprep.subr.mxu0 0.0
  %507 = vmatpush2.msra.mxu0 0.0
  %508 = vmatprep.subr.mxu0 0.0
  %509 = vmatpush2.msra.mxu0 0.0
  %510 = vmatprep.subr.mxu0 0.0
  %511 = vmatpush2.msra.mxu0 0.0
  %512 = vmatprep.subr.mxu0 0.0
  %513 = vmatpush2.msra.mxu0 0.0
  %514 = vmatprep.subr.mxu0 0.0
  %515 = vmatpush2.msra.mxu0 0.0
  %516 = vmatprep.subr.mxu0 0.0
  %517 = vmatpush2.msra.mxu0 0.0
  %518 = vmatprep.subr.mxu0 0.0
  %519 = vmatpush2.msra.mxu0 0.0
  %520 = vmatprep.subr.mxu0 0.0
  %521 = vmatpush2.msra.mxu0 0.0
  %522 = vmatprep.subr.mxu0 0.0
  %523 = vmatpush2.msra.mxu0 0.0
  %524 = vmatprep.subr.mxu0 0.0
  %525 = vmatpush2.msra.mxu0 0.0
  %526 = vmatprep.subr.mxu0 0.0
  %527 = vmatpush2.msra.mxu0 0.0
  %528 = vmatprep.subr.mxu0 0.0
  %529 = vmatpush2.msra.mxu0 0.0
  %530 = vmatprep.mubr.f32.mxu0 0.0
  %531 = vmatmul.mubr.f32.gmra.mxu0 %v57
  %v532 = vpop.f32.mrf.mxu0
  %v533 = vadd.f32 0.0, %v532
  %v534 = vpop.f32.mrf.mxu0
  %v535 = vadd.f32 0.0, %v534
  %536 = vdwg.mxu0
  %537 = vmatprep.subr.mxu0 0.0
  %538 = vmatpush1.msra.mxu0 0.0
  %539 = vmatprep.subr.mxu0 0.0
  %540 = vmatpush1.msra.mxu0 0.0
  %541 = vmatprep.subr.mxu0 0.0
  %542 = vmatpush1.msra.mxu0 0.0
  %543 = vmatprep.subr.mxu0 0.0
  %544 = vmatpush1.msra.mxu0 0.0
  %545 = vmatprep.subr.mxu0 0.0
  %546 = vmatpush1.msra.mxu0 0.0
  %547 = vmatprep.subr.mxu0 0.0
  %548 = vmatpush1.msra.mxu0 0.0
  %549 = vmatprep.subr.mxu0 %v464
  %550 = vmatpush1.msra.mxu0 %v461
  %551 = vmatprep.subr.mxu0 %v449
  %552 = vmatpush1.msra.mxu0 %v448
  %553 = vmatprep.subr.mxu0 %v445
  %554 = vmatpush1.msra.mxu0 %v444
  %555 = vmatprep.subr.mxu0 %v441
  %556 = vmatpush1.msra.mxu0 %v440
  %557 = vmatprep.subr.mxu0 %v437
  %558 = vmatpush1.msra.mxu0 %v436
  %559 = vmatprep.subr.mxu0 %v433
  %560 = vmatpush1.msra.mxu0 %v432
  %561 = vmatprep.subr.mxu0 %v429
  %562 = vmatpush1.msra.mxu0 %v428
  %563 = vmatprep.subr.mxu0 %v425
  %564 = vmatpush1.msra.mxu0 %v424
  %565 = vmatprep.subr.mxu0 %v421
  %566 = vmatpush1.msra.mxu0 %v420
  %567 = vmatprep.subr.mxu0 %v417
  %568 = vmatpush1.msra.mxu0 %v416
  %569 = vmatprep.subr.mxu0 0.0
  %570 = vmatpush2.msra.mxu0 0.0
  %571 = vmatprep.subr.mxu0 0.0
  %572 = vmatpush2.msra.mxu0 0.0
  %573 = vmatprep.subr.mxu0 0.0
  %574 = vmatpush2.msra.mxu0 0.0
  %575 = vmatprep.subr.mxu0 0.0
  %576 = vmatpush2.msra.mxu0 0.0
  %577 = vmatprep.subr.mxu0 0.0
  %578 = vmatpush2.msra.mxu0 0.0
  %579 = vmatprep.subr.mxu0 0.0
  %580 = vmatpush2.msra.mxu0 0.0
  %581 = vmatprep.subr.mxu0 0.0
  %582 = vmatpush2.msra.mxu0 0.0
  %583 = vmatprep.subr.mxu0 0.0
  %584 = vmatpush2.msra.mxu0 0.0
  %585 = vmatprep.subr.mxu0 0.0
  %586 = vmatpush2.msra.mxu0 0.0
  %587 = vmatprep.subr.mxu0 0.0
  %588 = vmatpush2.msra.mxu0 0.0
  %589 = vmatprep.subr.mxu0 0.0
  %590 = vmatpush2.msra.mxu0 0.0
  %591 = vmatprep.subr.mxu0 0.0
  %592 = vmatpush2.msra.mxu0 0.0
  %593 = vmatprep.subr.mxu0 0.0
  %594 = vmatpush2.msra.mxu0 0.0
  %595 = vmatprep.subr.mxu0 0.0
  %596 = vmatpush2.msra.mxu0 0.0
  %597 = vmatprep.subr.mxu0 0.0
  %598 = vmatpush2.msra.mxu0 0.0
  %599 = vmatprep.subr.mxu0 0.0
  %600 = vmatpush2.msra.mxu0 0.0
  %601 = vmatprep.mubr.f32.mxu0 0.0
  %602 = vmatmul.mubr.f32.gmra.mxu0 %v57
  %v603 = vpop.f32.mrf.mxu0
  %v604 = vadd.f32 0.0, %v603
  %v605 = vpop.f32.mrf.mxu0
  %v606 = vadd.f32 0.0, %v605
  %607 = vdwg.mxu0
  %v608 = vmax.f32 %v409, %v533
  %v609 = vmax.f32 %v410, %v535
  %v610 = vmax.f32 %v411, %v604
  %v611 = vmax.f32 %v412, %v606
  %s612 = scalar_lea.vmem %s0, 960
  %v613 = vld [vmem:[%s612] sm:$0xff]
  %v614 = vld [vmem:[%s612 + $0x8] sm:$0xff]
  %v615 = vld [vmem:[%s612 + $0x10] sm:$0xff]
  %v616 = vld [vmem:[%s612 + $0x18] sm:$0xff]
  %v617 = vld [vmem:[%s612 + $0x20] sm:$0xff]
  %v618 = vld [vmem:[%s612 + $0x28] sm:$0xff]
  %v619 = vld [vmem:[%s612 + $0x30] sm:$0xff]
  %v620 = vld [vmem:[%s612 + $0x38] sm:$0xff]
  %v621 = vld [vmem:[%s612 + $0x40] sm:$0xff]
  %v622 = vld [vmem:[%s612 + $0x48] sm:$0xff]
  %v623 = vld [vmem:[%s612 + $0x50] sm:$0xff]
  %v624 = vld [vmem:[%s612 + $0x58] sm:$0xff]
  %v625 = vld [vmem:[%s612 + $0x60] sm:$0xff]
  %v626 = vld [vmem:[%s612 + $0x68] sm:$0xff]
  %v627 = vld [vmem:[%s612 + $0x70] sm:$0xff]
  %v628 = vld [vmem:[%s612 + $0x78] sm:$0xff]
  %v629 = vld [vmem:[%s612 + $0x80] sm:$0xff]
  %v630 = vld [vmem:[%s612 + $0x88] sm:$0xff]
  %v631 = vld [vmem:[%s612 + $0x90] sm:$0xff]
  %v632 = vld [vmem:[%s612 + $0x98] sm:$0xff]
  %v633 = vld [vmem:[%s612 + $0xa0] sm:$0xff]
  %v634 = vld [vmem:[%s612 + $0xa8] sm:$0xff]
  %v635 = vld [vmem:[%s612 + $0xb0] sm:$0xff]
  %v636 = vld [vmem:[%s612 + $0xb8] sm:$0xff]
  %v637 = vld [vmem:[%s612 + $0xc0] sm:$0xff]
  %v638 = vld [vmem:[%s612 + $0xc8] sm:$0xff]
  %v639 = vld [vmem:[%s612 + $0xd0] sm:$0xff]
  %v640 = vld [vmem:[%s612 + $0xd8] sm:$0xff]
  %v641 = vld [vmem:[%s612 + $0xe0] sm:$0xff]
  %v642 = vld [vmem:[%s612 + $0xe8] sm:$0xff]
  %v643 = vld [vmem:[%s612 + $0xf0] sm:$0xff]
  %v644 = vld [vmem:[%s612 + $0xf8] sm:$0xff]
  %v645 = vld [vmem:[%s612 + $0x100] sm:$0xff]
  %v646 = vld [vmem:[%s612 + $0x108] sm:$0xff]
  %v647 = vld [vmem:[%s612 + $0x110] sm:$0xff]
  %v648 = vld [vmem:[%s612 + $0x118] sm:$0xff]
  %v649 = vld [vmem:[%s612 + $0x120] sm:$0x7]
  %v650 = vld [vmem:[%s612 + $0x128] sm:$0x7]
  %v651 = vld [vmem:[%s612 + $0x130] sm:$0x7]
  %v652 = vld [vmem:[%s612 + $0x138] sm:$0x7]
  %v654 = vsel %vm59, %v649, 0
  %v657 = vsel %vm59, %v650, 0
  %v660 = vsel %vm59, %v651, 0
  %v663 = vsel %vm59, %v652, 0
  %665 = vmatprep.subr.mxu0 0.0
  %666 = vmatpush1.msra.mxu0 0.0
  %667 = vmatprep.subr.mxu0 0.0
  %668 = vmatpush1.msra.mxu0 0.0
  %669 = vmatprep.subr.mxu0 0.0
  %670 = vmatpush1.msra.mxu0 0.0
  %671 = vmatprep.subr.mxu0 0.0
  %672 = vmatpush1.msra.mxu0 0.0
  %673 = vmatprep.subr.mxu0 0.0
  %674 = vmatpush1.msra.mxu0 0.0
  %675 = vmatprep.subr.mxu0 0.0
  %676 = vmatpush1.msra.mxu0 0.0
  %677 = vmatprep.subr.mxu0 %v657
  %678 = vmatpush1.msra.mxu0 %v654
  %679 = vmatprep.subr.mxu0 %v646
  %680 = vmatpush1.msra.mxu0 %v645
  %681 = vmatprep.subr.mxu0 %v642
  %682 = vmatpush1.msra.mxu0 %v641
  %683 = vmatprep.subr.mxu0 %v638
  %684 = vmatpush1.msra.mxu0 %v637
  %685 = vmatprep.subr.mxu0 %v634
  %686 = vmatpush1.msra.mxu0 %v633
  %687 = vmatprep.subr.mxu0 %v630
  %688 = vmatpush1.msra.mxu0 %v629
  %689 = vmatprep.subr.mxu0 %v626
  %690 = vmatpush1.msra.mxu0 %v625
  %691 = vmatprep.subr.mxu0 %v622
  %692 = vmatpush1.msra.mxu0 %v621
  %693 = vmatprep.subr.mxu0 %v618
  %694 = vmatpush1.msra.mxu0 %v617
  %695 = vmatprep.subr.mxu0 %v614
  %696 = vmatpush1.msra.mxu0 %v613
  %697 = vmatprep.subr.mxu0 0.0
  %698 = vmatpush2.msra.mxu0 0.0
  %699 = vmatprep.subr.mxu0 0.0
  %700 = vmatpush2.msra.mxu0 0.0
  %701 = vmatprep.subr.mxu0 0.0
  %702 = vmatpush2.msra.mxu0 0.0
  %703 = vmatprep.subr.mxu0 0.0
  %704 = vmatpush2.msra.mxu0 0.0
  %705 = vmatprep.subr.mxu0 0.0
  %706 = vmatpush2.msra.mxu0 0.0
  %707 = vmatprep.subr.mxu0 0.0
  %708 = vmatpush2.msra.mxu0 0.0
  %709 = vmatprep.subr.mxu0 0.0
  %710 = vmatpush2.msra.mxu0 0.0
  %711 = vmatprep.subr.mxu0 0.0
  %712 = vmatpush2.msra.mxu0 0.0
  %713 = vmatprep.subr.mxu0 0.0
  %714 = vmatpush2.msra.mxu0 0.0
  %715 = vmatprep.subr.mxu0 0.0
  %716 = vmatpush2.msra.mxu0 0.0
  %717 = vmatprep.subr.mxu0 0.0
  %718 = vmatpush2.msra.mxu0 0.0
  %719 = vmatprep.subr.mxu0 0.0
  %720 = vmatpush2.msra.mxu0 0.0
  %721 = vmatprep.subr.mxu0 0.0
  %722 = vmatpush2.msra.mxu0 0.0
  %723 = vmatprep.subr.mxu0 0.0
  %724 = vmatpush2.msra.mxu0 0.0
  %725 = vmatprep.subr.mxu0 0.0
  %726 = vmatpush2.msra.mxu0 0.0
  %727 = vmatprep.subr.mxu0 0.0
  %728 = vmatpush2.msra.mxu0 0.0
  %729 = vmatprep.mubr.f32.mxu0 0.0
  %730 = vmatmul.mubr.f32.gmra.mxu0 %v57
  %v731 = vpop.f32.mrf.mxu0
  %v732 = vadd.f32 0.0, %v731
  %v733 = vpop.f32.mrf.mxu0
  %v734 = vadd.f32 0.0, %v733
  %735 = vdwg.mxu0
  %736 = vmatprep.subr.mxu0 0.0
  %737 = vmatpush1.msra.mxu0 0.0
  %738 = vmatprep.subr.mxu0 0.0
  %739 = vmatpush1.msra.mxu0 0.0
  %740 = vmatprep.subr.mxu0 0.0
  %741 = vmatpush1.msra.mxu0 0.0
  %742 = vmatprep.subr.mxu0 0.0
  %743 = vmatpush1.msra.mxu0 0.0
  %744 = vmatprep.subr.mxu0 0.0
  %745 = vmatpush1.msra.mxu0 0.0
  %746 = vmatprep.subr.mxu0 0.0
  %747 = vmatpush1.msra.mxu0 0.0
  %748 = vmatprep.subr.mxu0 %v663
  %749 = vmatpush1.msra.mxu0 %v660
  %750 = vmatprep.subr.mxu0 %v648
  %751 = vmatpush1.msra.mxu0 %v647
  %752 = vmatprep.subr.mxu0 %v644
  %753 = vmatpush1.msra.mxu0 %v643
  %754 = vmatprep.subr.mxu0 %v640
  %755 = vmatpush1.msra.mxu0 %v639
  %756 = vmatprep.subr.mxu0 %v636
  %757 = vmatpush1.msra.mxu0 %v635
  %758 = vmatprep.subr.mxu0 %v632
  %759 = vmatpush1.msra.mxu0 %v631
  %760 = vmatprep.subr.mxu0 %v628
  %761 = vmatpush1.msra.mxu0 %v627
  %762 = vmatprep.subr.mxu0 %v624
  %763 = vmatpush1.msra.mxu0 %v623
  %764 = vmatprep.subr.mxu0 %v620
  %765 = vmatpush1.msra.mxu0 %v619
  %766 = vmatprep.subr.mxu0 %v616
  %767 = vmatpush1.msra.mxu0 %v615
  %768 = vmatprep.subr.mxu0 0.0
  %769 = vmatpush2.msra.mxu0 0.0
  %770 = vmatprep.subr.mxu0 0.0
  %771 = vmatpush2.msra.mxu0 0.0
  %772 = vmatprep.subr.mxu0 0.0
  %773 = vmatpush2.msra.mxu0 0.0
  %774 = vmatprep.subr.mxu0 0.0
  %775 = vmatpush2.msra.mxu0 0.0
  %776 = vmatprep.subr.mxu0 0.0
  %777 = vmatpush2.msra.mxu0 0.0
  %778 = vmatprep.subr.mxu0 0.0
  %779 = vmatpush2.msra.mxu0 0.0
  %780 = vmatprep.subr.mxu0 0.0
  %781 = vmatpush2.msra.mxu0 0.0
  %782 = vmatprep.subr.mxu0 0.0
  %783 = vmatpush2.msra.mxu0 0.0
  %784 = vmatprep.subr.mxu0 0.0
  %785 = vmatpush2.msra.mxu0 0.0
  %786 = vmatprep.subr.mxu0 0.0
  %787 = vmatpush2.msra.mxu0 0.0
  %788 = vmatprep.subr.mxu0 0.0
  %789 = vmatpush2.msra.mxu0 0.0
  %790 = vmatprep.subr.mxu0 0.0
  %791 = vmatpush2.msra.mxu0 0.0
  %792 = vmatprep.subr.mxu0 0.0
  %793 = vmatpush2.msra.mxu0 0.0
  %794 = vmatprep.subr.mxu0 0.0
  %795 = vmatpush2.msra.mxu0 0.0
  %796 = vmatprep.subr.mxu0 0.0
  %797 = vmatpush2.msra.mxu0 0.0
  %798 = vmatprep.subr.mxu0 0.0
  %799 = vmatpush2.msra.mxu0 0.0
  %800 = vmatprep.mubr.f32.mxu0 0.0
  %801 = vmatmul.mubr.f32.gmra.mxu0 %v57
  %v802 = vpop.f32.mrf.mxu0
  %v803 = vadd.f32 0.0, %v802
  %v804 = vpop.f32.mrf.mxu0
  %v805 = vadd.f32 0.0, %v804
  %806 = vdwg.mxu0
  %v807 = vmax.f32 %v608, %v732
  %v808 = vmax.f32 %v609, %v734
  %v809 = vmax.f32 %v610, %v803
  %v810 = vmax.f32 %v611, %v805
  %v811 = vld [vmem:[%s2] sm:$0x3f]
  %813 = vset.pattern.permute.xlu0 0
  %814 = vperm.xlu0 %813, %v811
  %v815 = vpop.permute.xlu0 %814
  %v817 = vadd.f32 %v807, %v815
  %v818 = vadd.f32 %v808, %v815
  %v819 = vadd.f32 %v809, %v815
  %v820 = vadd.f32 %v810, %v815
  %v821 = vmax.f32 %v817, 0.0
  %v822 = vmax.f32 %v818, 0.0
  %v823 = vmax.f32 %v819, 0.0
  %v824 = vmax.f32 %v820, 0.0
  %825 = vst [vmem:[%s3] sm:$0x3f] %v821
  %826 = vst [vmem:[%s3 + $0x8] sm:$0x3f] %v822
  %827 = vst [vmem:[%s3 + $0x10] sm:$0x3f] %v823
  %vm828 = vcmask 62464
  %829 = vst.msk [vmem:[%s3 + $0x18] sm:$0x3f] %vm828, %v824
  // Predicated region
  $region14: #{net_forward.3} parent=0 // pred_check
    _
  $region15: #{net_forward.3} parent=0 // pred_check_branch
    %831 = sbr.rel (0) target = $region17
  $region16: #{net_forward.3} parent=0 // pred_region
    _
  $region17: #{net_forward.3} parent=0 // pred_fallthru
    _
  // Predicated region
  $region18: #{net_forward.3} parent=0 // pred_check
    _
  $region19: #{net_forward.3} parent=0 // pred_check_branch
    %833 = sbr.rel (0) target = $region21
  $region20: #{net_forward.3} parent=0 // pred_region
    _
  $region21: #{net_forward.3} parent=0 // pred_fallthru
    _

// kernel: net_forward.4
$region0: #{net_forward.4}
  #allocation0 [shape = 'u32[]', space=smem, size = 0x4, offset = 0x4, fixed_abs, tag = 'smem constant byte address 0x4 - core index']
  #allocation1 [shape = 'u32[144,128]{1,0:T(1,128)}', space=vmem, size = 0x12000, scoped, tag = 'internal scratch']
  %s0 = inlined_call_operand.vmem [shape: f32[4,150,50], index: 0, kind: input, shape index: {}]
  %s1 = inlined_call_operand.vmem [shape: f32[16,150], index: 1, kind: input, shape index: {}]
  %s2 = inlined_call_operand.vmem [shape: f32[16,1], index: 2, kind: input, shape index: {}]
  %s3 = inlined_call_operand.vmem [shape: f32[16,50], index: 3, kind: output, shape index: {}]
  %s4 = sld [smem:[#allocation0]]
  $region22: #{net_forward.4} parent=0
    _
  %s6 = ssub.s32 1, %s4
  %s7 = scalar_select 0, %s6, %s4
  // Predicated region
  $region2: #{net_forward.4} parent=0 // pred_check
    _
  $region3: #{net_forward.4} parent=0 // pred_check_branch
    %9 = sbr.rel (0) target = $region5
  $region4: #{net_forward.4} parent=0 // pred_region
    _
  $region5: #{net_forward.4} parent=0 // pred_fallthru
    _
  // Predicated region
  $region6: #{net_forward.4} parent=0 // pred_check
    _
  $region7: #{net_forward.4} parent=0 // pred_check_branch
    %11 = sbr.rel (0) target = $region9
  $region8: #{net_forward.4} parent=0 // pred_region
    _
  $region9: #{net_forward.4} parent=0 // pred_fallthru
    _
  // Predicated region
  $region10: #{net_forward.4} parent=0 // pred_check
    _
  $region11: #{net_forward.4} parent=0 // pred_check_branch
    %13 = sbr.rel (0) target = $region13
  $region12: #{net_forward.4} parent=0 // pred_region
    _
  $region13: #{net_forward.4} parent=0 // pred_fallthru
    _
  %v14 = vld [vmem:[%s1] sm:$0xff]
  %v15 = vld [vmem:[%s1 + $0x8] sm:$0xff]
  %v16 = vld [vmem:[%s1 + $0x10] sm:$0xff]
  %v17 = vld [vmem:[%s1 + $0x18] sm:$0xff]
  %v18 = vld [vmem:[%s0] sm:$0xff]
  %v19 = vld [vmem:[%s0 + $0x8] sm:$0xff]
  %v20 = vld [vmem:[%s0 + $0x10] sm:$0xff]
  %v21 = vld [vmem:[%s0 + $0x18] sm:$0xff]
  %v22 = vld [vmem:[%s0 + $0x20] sm:$0xff]
  %v23 = vld [vmem:[%s0 + $0x28] sm:$0xff]
  %v24 = vld [vmem:[%s0 + $0x30] sm:$0xff]
  %v25 = vld [vmem:[%s0 + $0x38] sm:$0xff]
  %v26 = vld [vmem:[%s0 + $0x40] sm:$0xff]
  %v27 = vld [vmem:[%s0 + $0x48] sm:$0xff]
  %v28 = vld [vmem:[%s0 + $0x50] sm:$0xff]
  %v29 = vld [vmem:[%s0 + $0x58] sm:$0xff]
  %v30 = vld [vmem:[%s0 + $0x60] sm:$0xff]
  %v31 = vld [vmem:[%s0 + $0x68] sm:$0xff]
  %v32 = vld [vmem:[%s0 + $0x70] sm:$0xff]
  %v33 = vld [vmem:[%s0 + $0x78] sm:$0xff]
  %v34 = vld [vmem:[%s0 + $0x80] sm:$0xff]
  %v35 = vld [vmem:[%s0 + $0x88] sm:$0xff]
  %v36 = vld [vmem:[%s0 + $0x90] sm:$0x3f]
  %vm37 = vcmask 179200
  %v39 = vsel %vm37, %v15, 0
  %v42 = vsel %vm37, %v17, 0
  %vm44 = vcmask 1045504
  %v46 = vsel %vm44, %v36, 0
  %48 = vmatprep.subr.mxu0 0.0
  %49 = vmatpush1.msra.mxu0 %v33
  %50 = vmatprep.subr.mxu0 0.0
  %51 = vmatpush1.msra.mxu0 %v32
  %52 = vmatprep.subr.mxu0 0.0
  %53 = vmatpush1.msra.mxu0 %v31
  %54 = vmatprep.subr.mxu0 0.0
  %55 = vmatpush1.msra.mxu0 %v30
  %56 = vmatprep.subr.mxu0 0.0
  %57 = vmatpush1.msra.mxu0 %v29
  %58 = vmatprep.subr.mxu0 0.0
  %59 = vmatpush1.msra.mxu0 %v28
  %60 = vmatprep.subr.mxu0 0.0
  %61 = vmatpush1.msra.mxu0 %v27
  %62 = vmatprep.subr.mxu0 0.0
  %63 = vmatpush1.msra.mxu0 %v26
  %64 = vmatprep.subr.mxu0 0.0
  %65 = vmatpush1.msra.mxu0 %v25
  %66 = vmatprep.subr.mxu0 0.0
  %67 = vmatpush1.msra.mxu0 %v24
  %68 = vmatprep.subr.mxu0 0.0
  %69 = vmatpush1.msra.mxu0 %v23
  %70 = vmatprep.subr.mxu0 0.0
  %71 = vmatpush1.msra.mxu0 %v22
  %72 = vmatprep.subr.mxu0 0.0
  %73 = vmatpush1.msra.mxu0 %v21
  %74 = vmatprep.subr.mxu0 0.0
  %75 = vmatpush1.msra.mxu0 %v20
  %76 = vmatprep.subr.mxu0 0.0
  %77 = vmatpush1.msra.mxu0 %v19
  %78 = vmatprep.subr.mxu0 0.0
  %79 = vmatpush1.msra.mxu0 %v18
  %80 = vmatprep.subr.mxu0 0.0
  %81 = vmatpush2.msra.mxu0 0.0
  %82 = vmatprep.subr.mxu0 0.0
  %83 = vmatpush2.msra.mxu0 0.0
  %84 = vmatprep.subr.mxu0 0.0
  %85 = vmatpush2.msra.mxu0 0.0
  %86 = vmatprep.subr.mxu0 0.0
  %87 = vmatpush2.msra.mxu0 0.0
  %88 = vmatprep.subr.mxu0 0.0
  %89 = vmatpush2.msra.mxu0 0.0
  %90 = vmatprep.subr.mxu0 0.0
  %91 = vmatpush2.msra.mxu0 0.0
  %92 = vmatprep.subr.mxu0 0.0
  %93 = vmatpush2.msra.mxu0 0.0
  %94 = vmatprep.subr.mxu0 0.0
  %95 = vmatpush2.msra.mxu0 0.0
  %96 = vmatprep.subr.mxu0 0.0
  %97 = vmatpush2.msra.mxu0 0.0
  %98 = vmatprep.subr.mxu0 0.0
  %99 = vmatpush2.msra.mxu0 0.0
  %100 = vmatprep.subr.mxu0 0.0
  %101 = vmatpush2.msra.mxu0 0.0
  %102 = vmatprep.subr.mxu0 0.0
  %103 = vmatpush2.msra.mxu0 0.0
  %104 = vmatprep.subr.mxu0 0.0
  %105 = vmatpush2.msra.mxu0 0.0
  %106 = vmatprep.subr.mxu0 0.0
  %107 = vmatpush2.msra.mxu0 %v46
  %108 = vmatprep.subr.mxu0 0.0
  %109 = vmatpush2.msra.mxu0 %v35
  %110 = vmatprep.subr.mxu0 0.0
  %111 = vmatpush2.msra.mxu0 %v34
  %112 = vmatprep.mubr.f32.mxu0 %v39
  %113 = vmatmul.mubr.f32.gmra.mxu0 %v14
  %v114 = vpop.f32.mrf.mxu0
  %v115 = vadd.f32 0.0, %v114
  %v116 = vpop.f32.mrf.mxu0
  %117 = vmatprep.mubr.f32.mxu0 %v42
  %118 = vmatmul.mubr.f32.gmra.mxu0 %v16
  %v119 = vpop.f32.mrf.mxu0
  %v120 = vadd.f32 0.0, %v119
  %v121 = vpop.f32.mrf.mxu0
  %122 = vdwg.mxu0
  %s123 = scalar_lea.vmem %s0, 152
  %v124 = vld [vmem:[%s123] sm:$0xff]
  %v125 = vld [vmem:[%s123 + $0x8] sm:$0xff]
  %v126 = vld [vmem:[%s123 + $0x10] sm:$0xff]
  %v127 = vld [vmem:[%s123 + $0x18] sm:$0xff]
  %v128 = vld [vmem:[%s123 + $0x20] sm:$0xff]
  %v129 = vld [vmem:[%s123 + $0x28] sm:$0xff]
  %v130 = vld [vmem:[%s123 + $0x30] sm:$0xff]
  %v131 = vld [vmem:[%s123 + $0x38] sm:$0xff]
  %v132 = vld [vmem:[%s123 + $0x40] sm:$0xff]
  %v133 = vld [vmem:[%s123 + $0x48] sm:$0xff]
  %v134 = vld [vmem:[%s123 + $0x50] sm:$0xff]
  %v135 = vld [vmem:[%s123 + $0x58] sm:$0xff]
  %v136 = vld [vmem:[%s123 + $0x60] sm:$0xff]
  %v137 = vld [vmem:[%s123 + $0x68] sm:$0xff]
  %v138 = vld [vmem:[%s123 + $0x70] sm:$0xff]
  %v139 = vld [vmem:[%s123 + $0x78] sm:$0xff]
  %v140 = vld [vmem:[%s123 + $0x80] sm:$0xff]
  %v141 = vld [vmem:[%s123 + $0x88] sm:$0xff]
  %v142 = vld [vmem:[%s123 + $0x90] sm:$0x3f]
  %v144 = vsel %vm44, %v142, 0
  %146 = vmatprep.subr.mxu0 0.0
  %147 = vmatpush1.msra.mxu0 %v139
  %148 = vmatprep.subr.mxu0 0.0
  %149 = vmatpush1.msra.mxu0 %v138
  %150 = vmatprep.subr.mxu0 0.0
  %151 = vmatpush1.msra.mxu0 %v137
  %152 = vmatprep.subr.mxu0 0.0
  %153 = vmatpush1.msra.mxu0 %v136
  %154 = vmatprep.subr.mxu0 0.0
  %155 = vmatpush1.msra.mxu0 %v135
  %156 = vmatprep.subr.mxu0 0.0
  %157 = vmatpush1.msra.mxu0 %v134
  %158 = vmatprep.subr.mxu0 0.0
  %159 = vmatpush1.msra.mxu0 %v133
  %160 = vmatprep.subr.mxu0 0.0
  %161 = vmatpush1.msra.mxu0 %v132
  %162 = vmatprep.subr.mxu0 0.0
  %163 = vmatpush1.msra.mxu0 %v131
  %164 = vmatprep.subr.mxu0 0.0
  %165 = vmatpush1.msra.mxu0 %v130
  %166 = vmatprep.subr.mxu0 0.0
  %167 = vmatpush1.msra.mxu0 %v129
  %168 = vmatprep.subr.mxu0 0.0
  %169 = vmatpush1.msra.mxu0 %v128
  %170 = vmatprep.subr.mxu0 0.0
  %171 = vmatpush1.msra.mxu0 %v127
  %172 = vmatprep.subr.mxu0 0.0
  %173 = vmatpush1.msra.mxu0 %v126
  %174 = vmatprep.subr.mxu0 0.0
  %175 = vmatpush1.msra.mxu0 %v125
  %176 = vmatprep.subr.mxu0 0.0
  %177 = vmatpush1.msra.mxu0 %v124
  %178 = vmatprep.subr.mxu0 0.0
  %179 = vmatpush2.msra.mxu0 0.0
  %180 = vmatprep.subr.mxu0 0.0
  %181 = vmatpush2.msra.mxu0 0.0
  %182 = vmatprep.subr.mxu0 0.0
  %183 = vmatpush2.msra.mxu0 0.0
  %184 = vmatprep.subr.mxu0 0.0
  %185 = vmatpush2.msra.mxu0 0.0
  %186 = vmatprep.subr.mxu0 0.0
  %187 = vmatpush2.msra.mxu0 0.0
  %188 = vmatprep.subr.mxu0 0.0
  %189 = vmatpush2.msra.mxu0 0.0
  %190 = vmatprep.subr.mxu0 0.0
  %191 = vmatpush2.msra.mxu0 0.0
  %192 = vmatprep.subr.mxu0 0.0
  %193 = vmatpush2.msra.mxu0 0.0
  %194 = vmatprep.subr.mxu0 0.0
  %195 = vmatpush2.msra.mxu0 0.0
  %196 = vmatprep.subr.mxu0 0.0
  %197 = vmatpush2.msra.mxu0 0.0
  %198 = vmatprep.subr.mxu0 0.0
  %199 = vmatpush2.msra.mxu0 0.0
  %200 = vmatprep.subr.mxu0 0.0
  %201 = vmatpush2.msra.mxu0 0.0
  %202 = vmatprep.subr.mxu0 0.0
  %203 = vmatpush2.msra.mxu0 0.0
  %204 = vmatprep.subr.mxu0 0.0
  %205 = vmatpush2.msra.mxu0 %v144
  %206 = vmatprep.subr.mxu0 0.0
  %207 = vmatpush2.msra.mxu0 %v141
  %208 = vmatprep.subr.mxu0 0.0
  %209 = vmatpush2.msra.mxu0 %v140
  %210 = vmatprep.mubr.f32.mxu0 %v39
  %211 = vmatmul.mubr.f32.gmra.mxu0 %v14
  %v212 = vpop.f32.mrf.mxu0
  %v213 = vadd.f32 0.0, %v212
  %v214 = vpop.f32.mrf.mxu0
  %215 = vmatprep.mubr.f32.mxu0 %v42
  %216 = vmatmul.mubr.f32.gmra.mxu0 %v16
  %v217 = vpop.f32.mrf.mxu0
  %v218 = vadd.f32 0.0, %v217
  %v219 = vpop.f32.mrf.mxu0
  %220 = vdwg.mxu0
  %v221 = vmax.f32 %v115, %v213
  %v222 = vmax.f32 %v120, %v218
  %s223 = scalar_lea.vmem %s0, 304
  %v224 = vld [vmem:[%s223] sm:$0xff]
  %v225 = vld [vmem:[%s223 + $0x8] sm:$0xff]
  %v226 = vld [vmem:[%s223 + $0x10] sm:$0xff]
  %v227 = vld [vmem:[%s223 + $0x18] sm:$0xff]
  %v228 = vld [vmem:[%s223 + $0x20] sm:$0xff]
  %v229 = vld [vmem:[%s223 + $0x28] sm:$0xff]
  %v230 = vld [vmem:[%s223 + $0x30] sm:$0xff]
  %v231 = vld [vmem:[%s223 + $0x38] sm:$0xff]
  %v232 = vld [vmem:[%s223 + $0x40] sm:$0xff]
  %v233 = vld [vmem:[%s223 + $0x48] sm:$0xff]
  %v234 = vld [vmem:[%s223 + $0x50] sm:$0xff]
  %v235 = vld [vmem:[%s223 + $0x58] sm:$0xff]
  %v236 = vld [vmem:[%s223 + $0x60] sm:$0xff]
  %v237 = vld [vmem:[%s223 + $0x68] sm:$0xff]
  %v238 = vld [vmem:[%s223 + $0x70] sm:$0xff]
  %v239 = vld [vmem:[%s223 + $0x78] sm:$0xff]
  %v240 = vld [vmem:[%s223 + $0x80] sm:$0xff]
  %v241 = vld [vmem:[%s223 + $0x88] sm:$0xff]
  %v242 = vld [vmem:[%s223 + $0x90] sm:$0x3f]
  %v244 = vsel %vm44, %v242, 0
  %246 = vmatprep.subr.mxu0 0.0
  %247 = vmatpush1.msra.mxu0 %v239
  %248 = vmatprep.subr.mxu0 0.0
  %249 = vmatpush1.msra.mxu0 %v238
  %250 = vmatprep.subr.mxu0 0.0
  %251 = vmatpush1.msra.mxu0 %v237
  %252 = vmatprep.subr.mxu0 0.0
  %253 = vmatpush1.msra.mxu0 %v236
  %254 = vmatprep.subr.mxu0 0.0
  %255 = vmatpush1.msra.mxu0 %v235
  %256 = vmatprep.subr.mxu0 0.0
  %257 = vmatpush1.msra.mxu0 %v234
  %258 = vmatprep.subr.mxu0 0.0
  %259 = vmatpush1.msra.mxu0 %v233
  %260 = vmatprep.subr.mxu0 0.0
  %261 = vmatpush1.msra.mxu0 %v232
  %262 = vmatprep.subr.mxu0 0.0
  %263 = vmatpush1.msra.mxu0 %v231
  %264 = vmatprep.subr.mxu0 0.0
  %265 = vmatpush1.msra.mxu0 %v230
  %266 = vmatprep.subr.mxu0 0.0
  %267 = vmatpush1.msra.mxu0 %v229
  %268 = vmatprep.subr.mxu0 0.0
  %269 = vmatpush1.msra.mxu0 %v228
  %270 = vmatprep.subr.mxu0 0.0
  %271 = vmatpush1.msra.mxu0 %v227
  %272 = vmatprep.subr.mxu0 0.0
  %273 = vmatpush1.msra.mxu0 %v226
  %274 = vmatprep.subr.mxu0 0.0
  %275 = vmatpush1.msra.mxu0 %v225
  %276 = vmatprep.subr.mxu0 0.0
  %277 = vmatpush1.msra.mxu0 %v224
  %278 = vmatprep.subr.mxu0 0.0
  %279 = vmatpush2.msra.mxu0 0.0
  %280 = vmatprep.subr.mxu0 0.0
  %281 = vmatpush2.msra.mxu0 0.0
  %282 = vmatprep.subr.mxu0 0.0
  %283 = vmatpush2.msra.mxu0 0.0
  %284 = vmatprep.subr.mxu0 0.0
  %285 = vmatpush2.msra.mxu0 0.0
  %286 = vmatprep.subr.mxu0 0.0
  %287 = vmatpush2.msra.mxu0 0.0
  %288 = vmatprep.subr.mxu0 0.0
  %289 = vmatpush2.msra.mxu0 0.0
  %290 = vmatprep.subr.mxu0 0.0
  %291 = vmatpush2.msra.mxu0 0.0
  %292 = vmatprep.subr.mxu0 0.0
  %293 = vmatpush2.msra.mxu0 0.0
  %294 = vmatprep.subr.mxu0 0.0
  %295 = vmatpush2.msra.mxu0 0.0
  %296 = vmatprep.subr.mxu0 0.0
  %297 = vmatpush2.msra.mxu0 0.0
  %298 = vmatprep.subr.mxu0 0.0
  %299 = vmatpush2.msra.mxu0 0.0
  %300 = vmatprep.subr.mxu0 0.0
  %301 = vmatpush2.msra.mxu0 0.0
  %302 = vmatprep.subr.mxu0 0.0
  %303 = vmatpush2.msra.mxu0 0.0
  %304 = vmatprep.subr.mxu0 0.0
  %305 = vmatpush2.msra.mxu0 %v244
  %306 = vmatprep.subr.mxu0 0.0
  %307 = vmatpush2.msra.mxu0 %v241
  %308 = vmatprep.subr.mxu0 0.0
  %309 = vmatpush2.msra.mxu0 %v240
  %310 = vmatprep.mubr.f32.mxu0 %v39
  %311 = vmatmul.mubr.f32.gmra.mxu0 %v14
  %v312 = vpop.f32.mrf.mxu0
  %v313 = vadd.f32 0.0, %v312
  %v314 = vpop.f32.mrf.mxu0
  %315 = vmatprep.mubr.f32.mxu0 %v42
  %316 = vmatmul.mubr.f32.gmra.mxu0 %v16
  %v317 = vpop.f32.mrf.mxu0
  %v318 = vadd.f32 0.0, %v317
  %v319 = vpop.f32.mrf.mxu0
  %320 = vdwg.mxu0
  %v321 = vmax.f32 %v221, %v313
  %v322 = vmax.f32 %v222, %v318
  %s323 = scalar_lea.vmem %s0, 456
  %v324 = vld [vmem:[%s323] sm:$0xff]
  %v325 = vld [vmem:[%s323 + $0x8] sm:$0xff]
  %v326 = vld [vmem:[%s323 + $0x10] sm:$0xff]
  %v327 = vld [vmem:[%s323 + $0x18] sm:$0xff]
  %v328 = vld [vmem:[%s323 + $0x20] sm:$0xff]
  %v329 = vld [vmem:[%s323 + $0x28] sm:$0xff]
  %v330 = vld [vmem:[%s323 + $0x30] sm:$0xff]
  %v331 = vld [vmem:[%s323 + $0x38] sm:$0xff]
  %v332 = vld [vmem:[%s323 + $0x40] sm:$0xff]
  %v333 = vld [vmem:[%s323 + $0x48] sm:$0xff]
  %v334 = vld [vmem:[%s323 + $0x50] sm:$0xff]
  %v335 = vld [vmem:[%s323 + $0x58] sm:$0xff]
  %v336 = vld [vmem:[%s323 + $0x60] sm:$0xff]
  %v337 = vld [vmem:[%s323 + $0x68] sm:$0xff]
  %v338 = vld [vmem:[%s323 + $0x70] sm:$0xff]
  %v339 = vld [vmem:[%s323 + $0x78] sm:$0xff]
  %v340 = vld [vmem:[%s323 + $0x80] sm:$0xff]
  %v341 = vld [vmem:[%s323 + $0x88] sm:$0xff]
  %v342 = vld [vmem:[%s323 + $0x90] sm:$0x3f]
  %v344 = vsel %vm44, %v342, 0
  %346 = vmatprep.subr.mxu0 0.0
  %347 = vmatpush1.msra.mxu0 %v339
  %348 = vmatprep.subr.mxu0 0.0
  %349 = vmatpush1.msra.mxu0 %v338
  %350 = vmatprep.subr.mxu0 0.0
  %351 = vmatpush1.msra.mxu0 %v337
  %352 = vmatprep.subr.mxu0 0.0
  %353 = vmatpush1.msra.mxu0 %v336
  %354 = vmatprep.subr.mxu0 0.0
  %355 = vmatpush1.msra.mxu0 %v335
  %356 = vmatprep.subr.mxu0 0.0
  %357 = vmatpush1.msra.mxu0 %v334
  %358 = vmatprep.subr.mxu0 0.0
  %359 = vmatpush1.msra.mxu0 %v333
  %360 = vmatprep.subr.mxu0 0.0
  %361 = vmatpush1.msra.mxu0 %v332
  %362 = vmatprep.subr.mxu0 0.0
  %363 = vmatpush1.msra.mxu0 %v331
  %364 = vmatprep.subr.mxu0 0.0
  %365 = vmatpush1.msra.mxu0 %v330
  %366 = vmatprep.subr.mxu0 0.0
  %367 = vmatpush1.msra.mxu0 %v329
  %368 = vmatprep.subr.mxu0 0.0
  %369 = vmatpush1.msra.mxu0 %v328
  %370 = vmatprep.subr.mxu0 0.0
  %371 = vmatpush1.msra.mxu0 %v327
  %372 = vmatprep.subr.mxu0 0.0
  %373 = vmatpush1.msra.mxu0 %v326
  %374 = vmatprep.subr.mxu0 0.0
  %375 = vmatpush1.msra.mxu0 %v325
  %376 = vmatprep.subr.mxu0 0.0
  %377 = vmatpush1.msra.mxu0 %v324
  %378 = vmatprep.subr.mxu0 0.0
  %379 = vmatpush2.msra.mxu0 0.0
  %380 = vmatprep.subr.mxu0 0.0
  %381 = vmatpush2.msra.mxu0 0.0
  %382 = vmatprep.subr.mxu0 0.0
  %383 = vmatpush2.msra.mxu0 0.0
  %384 = vmatprep.subr.mxu0 0.0
  %385 = vmatpush2.msra.mxu0 0.0
  %386 = vmatprep.subr.mxu0 0.0
  %387 = vmatpush2.msra.mxu0 0.0
  %388 = vmatprep.subr.mxu0 0.0
  %389 = vmatpush2.msra.mxu0 0.0
  %390 = vmatprep.subr.mxu0 0.0
  %391 = vmatpush2.msra.mxu0 0.0
  %392 = vmatprep.subr.mxu0 0.0
  %393 = vmatpush2.msra.mxu0 0.0
  %394 = vmatprep.subr.mxu0 0.0
  %395 = vmatpush2.msra.mxu0 0.0
  %396 = vmatprep.subr.mxu0 0.0
  %397 = vmatpush2.msra.mxu0 0.0
  %398 = vmatprep.subr.mxu0 0.0
  %399 = vmatpush2.msra.mxu0 0.0
  %400 = vmatprep.subr.mxu0 0.0
  %401 = vmatpush2.msra.mxu0 0.0
  %402 = vmatprep.subr.mxu0 0.0
  %403 = vmatpush2.msra.mxu0 0.0
  %404 = vmatprep.subr.mxu0 0.0
  %405 = vmatpush2.msra.mxu0 %v344
  %406 = vmatprep.subr.mxu0 0.0
  %407 = vmatpush2.msra.mxu0 %v341
  %408 = vmatprep.subr.mxu0 0.0
  %409 = vmatpush2.msra.mxu0 %v340
  %410 = vmatprep.mubr.f32.mxu0 %v39
  %411 = vmatmul.mubr.f32.gmra.mxu0 %v14
  %v412 = vpop.f32.mrf.mxu0
  %v413 = vadd.f32 0.0, %v412
  %v414 = vpop.f32.mrf.mxu0
  %415 = vmatprep.mubr.f32.mxu0 %v42
  %416 = vmatmul.mubr.f32.gmra.mxu0 %v16
  %v417 = vpop.f32.mrf.mxu0
  %v418 = vadd.f32 0.0, %v417
  %v419 = vpop.f32.mrf.mxu0
  %420 = vdwg.mxu0
  %v421 = vmax.f32 %v321, %v413
  %v422 = vmax.f32 %v322, %v418
  %v423 = vld [vmem:[%s2] sm:$0xff]
  %v424 = vld [vmem:[%s2 + $0x8] sm:$0xff]
  %426 = vset.pattern.permute.xlu0 0
  %427 = vperm.xlu0 %426, %v423
  %v428 = vpop.permute.xlu0 %427
  %431 = vset.pattern.permute.xlu0 0
  %432 = vperm.xlu0 %431, %v424
  %v433 = vpop.permute.xlu0 %432
  %v435 = vadd.f32 %v421, %v428
  %v436 = vadd.f32 %v422, %v433
  %v437 = vmax.f32 %v435, 0.0
  %v438 = vmax.f32 %v436, 0.0
  %vm439 = vcmask 408576
  %440 = vst.msk [vmem:[%s3] sm:$0xff] %vm439, %v437
  %441 = vst.msk [vmem:[%s3 + $0x8] sm:$0xff] %vm439, %v438
  // Predicated region
  $region14: #{net_forward.4} parent=0 // pred_check
    _
  $region15: #{net_forward.4} parent=0 // pred_check_branch
    %443 = sbr.rel (0) target = $region17
  $region16: #{net_forward.4} parent=0 // pred_region
    _
  $region17: #{net_forward.4} parent=0 // pred_fallthru
    _
  // Predicated region
  $region18: #{net_forward.4} parent=0 // pred_check
    _
  $region19: #{net_forward.4} parent=0 // pred_check_branch
    %445 = sbr.rel (0) target = $region21
  $region20: #{net_forward.4} parent=0 // pred_region
    _
  $region21: #{net_forward.4} parent=0 // pred_fallthru
    _

// kernel: net_forward.5
$region0: #{net_forward.5}
  #allocation0 [shape = 'u32[]', space=smem, size = 0x4, offset = 0x4, fixed_abs, tag = 'smem constant byte address 0x4 - core index']
  #allocation1 [shape = 'u32[144,128]{1,0:T(1,128)}', space=vmem, size = 0x12000, scoped, tag = 'internal scratch']
  %s0 = inlined_call_operand.vmem [shape: f32[2,400], index: 0, kind: input, shape index: {}]
  %s1 = inlined_call_operand.vmem [shape: f32[400,128], index: 1, kind: input, shape index: {}]
  %s2 = inlined_call_operand.vmem [shape: f32[1,128], index: 2, kind: input, shape index: {}]
  %s3 = inlined_call_operand.vmem [shape: f32[128,128], index: 3, kind: input, shape index: {}]
  %s4 = inlined_call_operand.vmem [shape: f32[1,128], index: 4, kind: input, shape index: {}]
  %s5 = inlined_call_operand.vmem [shape: f32[128,128], index: 5, kind: input, shape index: {}]
  %s6 = inlined_call_operand.vmem [shape: f32[1,128], index: 6, kind: input, shape index: {}]
  %s7 = inlined_call_operand.hbm [shape: f32[2,128], index: 7, kind: output, shape index: {}]
  %s8 = sld [smem:[#allocation0]]
  $region38: #{net_forward.5} parent=0
    _
  %s10 = ssub.s32 1, %s8
  %s11 = scalar_select 0, %s10, %s8
  $region1: #{net_forward.5} parent=0
    #allocation2 [shape = 'u8[1024]{0}', space=vmem, size = 0x400, scoped, tag = 'output window, operand 0, single buffered']
    #allocation3 [shape = 's32[1]{0}', space=sflag, size = 0x4, scoped, tag = 'scoped memory for net_forward.5']
    %12 = vsyncpa [#allocation3], 0
    // Predicated region
    $region2: #{net_forward.5} parent=1 // pred_check
      _
    $region3: #{net_forward.5} parent=1 // pred_check_branch
      %14 = sbr.rel (0) target = $region5
    $region4: #{net_forward.5} parent=1 // pred_region
      _
    $region5: #{net_forward.5} parent=1 // pred_fallthru
      _
    // Predicated region
    $region6: #{net_forward.5} parent=1 // pred_check
      _
    $region7: #{net_forward.5} parent=1 // pred_check_branch
      %16 = sbr.rel (0) target = $region9
    $region8: #{net_forward.5} parent=1 // pred_region
      _
    $region9: #{net_forward.5} parent=1 // pred_fallthru
      _
    // Predicated region
    $region10: #{net_forward.5} parent=1 // pred_check
      _
    $region11: #{net_forward.5} parent=1 // pred_check_branch
      %18 = sbr.rel (0) target = $region13
    $region12: #{net_forward.5} parent=1 // pred_region
      _
    $region13: #{net_forward.5} parent=1 // pred_fallthru
      _
    // Predicated region
    $region14: #{net_forward.5} parent=1 // pred_check
      _
    $region15: #{net_forward.5} parent=1 // pred_check_branch
      %20 = sbr.rel (0) target = $region17
    $region16: #{net_forward.5} parent=1 // pred_region
      _
    $region17: #{net_forward.5} parent=1 // pred_fallthru
      _
    // Predicated region
    $region18: #{net_forward.5} parent=1 // pred_check
      _
    $region19: #{net_forward.5} parent=1 // pred_check_branch
      %22 = sbr.rel (0) target = $region21
    $region20: #{net_forward.5} parent=1 // pred_region
      _
    $region21: #{net_forward.5} parent=1 // pred_fallthru
      _
    // Predicated region
    $region22: #{net_forward.5} parent=1 // pred_check
      _
    $region23: #{net_forward.5} parent=1 // pred_check_branch
      %24 = sbr.rel (0) target = $region25
    $region24: #{net_forward.5} parent=1 // pred_region
      _
    $region25: #{net_forward.5} parent=1 // pred_fallthru
      _
    // Predicated region
    $region26: #{net_forward.5} parent=1 // pred_check
      _
    $region27: #{net_forward.5} parent=1 // pred_check_branch
      %26 = sbr.rel (0) target = $region29
    $region28: #{net_forward.5} parent=1 // pred_region
      _
    $region29: #{net_forward.5} parent=1 // pred_fallthru
      _
    %v27 = vld [vmem:[%s0] sm:$0xff]
    %v28 = vld [vmem:[%s1] sm:$0xff]
    %v29 = vld [vmem:[%s1 + $0x8] sm:$0xff]
    %v30 = vld [vmem:[%s1 + $0x10] sm:$0xff]
    %v31 = vld [vmem:[%s1 + $0x18] sm:$0xff]
    %v32 = vld [vmem:[%s1 + $0x20] sm:$0xff]
    %v33 = vld [vmem:[%s1 + $0x28] sm:$0xff]
    %v34 = vld [vmem:[%s1 + $0x30] sm:$0xff]
    %v35 = vld [vmem:[%s1 + $0x38] sm:$0xff]
    %v36 = vld [vmem:[%s1 + $0x40] sm:$0xff]
    %v37 = vld [vmem:[%s1 + $0x48] sm:$0xff]
    %v38 = vld [vmem:[%s1 + $0x50] sm:$0xff]
    %v39 = vld [vmem:[%s1 + $0x58] sm:$0xff]
    %v40 = vld [vmem:[%s1 + $0x60] sm:$0xff]
    %v41 = vld [vmem:[%s1 + $0x68] sm:$0xff]
    %v42 = vld [vmem:[%s1 + $0x70] sm:$0xff]
    %v43 = vld [vmem:[%s1 + $0x78] sm:$0xff]
    %v44 = vld [vmem:[%s1 + $0x80] sm:$0xff]
    %v45 = vld [vmem:[%s1 + $0x88] sm:$0xff]
    %v46 = vld [vmem:[%s1 + $0x90] sm:$0xff]
    %v47 = vld [vmem:[%s1 + $0x98] sm:$0xff]
    %v48 = vld [vmem:[%s1 + $0xa0] sm:$0xff]
    %v49 = vld [vmem:[%s1 + $0xa8] sm:$0xff]
    %v50 = vld [vmem:[%s1 + $0xb0] sm:$0xff]
    %v51 = vld [vmem:[%s1 + $0xb8] sm:$0xff]
    %v52 = vld [vmem:[%s1 + $0xc0] sm:$0xff]
    %v53 = vld [vmem:[%s1 + $0xc8] sm:$0xff]
    %v54 = vld [vmem:[%s1 + $0xd0] sm:$0xff]
    %v55 = vld [vmem:[%s1 + $0xd8] sm:$0xff]
    %v56 = vld [vmem:[%s1 + $0xe0] sm:$0xff]
    %v57 = vld [vmem:[%s1 + $0xe8] sm:$0xff]
    %v58 = vld [vmem:[%s1 + $0xf0] sm:$0xff]
    %v59 = vld [vmem:[%s1 + $0xf8] sm:$0xff]
    %v60 = vld [vmem:[%s1 + $0x100] sm:$0xff]
    %v61 = vld [vmem:[%s1 + $0x108] sm:$0xff]
    %v62 = vld [vmem:[%s1 + $0x110] sm:$0xff]
    %v63 = vld [vmem:[%s1 + $0x118] sm:$0xff]
    %v64 = vld [vmem:[%s1 + $0x120] sm:$0xff]
    %v65 = vld [vmem:[%s1 + $0x128] sm:$0xff]
    %v66 = vld [vmem:[%s1 + $0x130] sm:$0xff]
    %v67 = vld [vmem:[%s1 + $0x138] sm:$0xff]
    %v68 = vld [vmem:[%s1 + $0x140] sm:$0xff]
    %v69 = vld [vmem:[%s1 + $0x148] sm:$0xff]
    %v70 = vld [vmem:[%s1 + $0x150] sm:$0xff]
    %v71 = vld [vmem:[%s1 + $0x158] sm:$0xff]
    %v72 = vld [vmem:[%s1 + $0x160] sm:$0xff]
    %v73 = vld [vmem:[%s1 + $0x168] sm:$0xff]
    %v74 = vld [vmem:[%s1 + $0x170] sm:$0xff]
    %v75 = vld [vmem:[%s1 + $0x178] sm:$0xff]
    %v76 = vld [vmem:[%s1 + $0x180] sm:$0xff]
    %v77 = vld [vmem:[%s1 + $0x188] sm:$0xff]
    %v78 = vld [vmem:[%s2] sm:$0x1]
    %v80 = vlaneseq
    %v81 = vshrl.u32 %v80, 7
    %v82 = vsub.s32 0, %v81
    %v83 = vrot.slane %v78, %v82
    %v86 = vcombine.high %v27, %v27
    %v88 = vunpack.c.l.s4 1983009808
    %v89 = vunpack.c.0.s8 %v88
    %v90 = vlaneseq
    %v91 = vshrl.u32 %v90, 7
    %v92 = vsub.s32 %v89, %v91
    %v93 = vrot.slane %v27, %v92
    %v95 = vunpack.c.l.s4 1983009808
    %v96 = vunpack.c.0.s8 %v95
    %v97 = vlaneseq
    %v98 = vshrl.u32 %v97, 7
    %v99 = vsub.s32 %v96, %v98
    %v100 = vrot.slane %v86, %v99
    %v101 = vcombine.high %v93, %v93
    %v102 = vcombine.high %v100, %v100
    %vm106 = vcmask 130048
    %v107 = vsel %vm106, %v102, 0
    %109 = vmatprep.subr.mxu0 0.0
    %110 = vmatpush1.msra.mxu0 %v43
    %111 = vmatprep.subr.mxu0 0.0
    %112 = vmatpush1.msra.mxu0 %v42
    %113 = vmatprep.subr.mxu0 0.0
    %114 = vmatpush1.msra.mxu0 %v41
    %115 = vmatprep.subr.mxu0 0.0
    %116 = vmatpush1.msra.mxu0 %v40
    %117 = vmatprep.subr.mxu0 0.0
    %118 = vmatpush1.msra.mxu0 %v39
    %119 = vmatprep.subr.mxu0 0.0
    %120 = vmatpush1.msra.mxu0 %v38
    %121 = vmatprep.subr.mxu0 0.0
    %122 = vmatpush1.msra.mxu0 %v37
    %123 = vmatprep.subr.mxu0 0.0
    %124 = vmatpush1.msra.mxu0 %v36
    %125 = vmatprep.subr.mxu0 0.0
    %126 = vmatpush1.msra.mxu0 %v35
    %127 = vmatprep.subr.mxu0 0.0
    %128 = vmatpush1.msra.mxu0 %v34
    %129 = vmatprep.subr.mxu0 0.0
    %130 = vmatpush1.msra.mxu0 %v33
    %131 = vmatprep.subr.mxu0 0.0
    %132 = vmatpush1.msra.mxu0 %v32
    %133 = vmatprep.subr.mxu0 0.0
    %134 = vmatpush1.msra.mxu0 %v31
    %135 = vmatprep.subr.mxu0 0.0
    %136 = vmatpush1.msra.mxu0 %v30
    %137 = vmatprep.subr.mxu0 0.0
    %138 = vmatpush1.msra.mxu0 %v29
    %139 = vmatprep.subr.mxu0 0.0
    %140 = vmatpush1.msra.mxu0 %v28
    %141 = vmatprep.subr.mxu0 0.0
    %142 = vmatpush2.msra.mxu0 %v59
    %143 = vmatprep.subr.mxu0 0.0
    %144 = vmatpush2.msra.mxu0 %v58
    %145 = vmatprep.subr.mxu0 0.0
    %146 = vmatpush2.msra.mxu0 %v57
    %147 = vmatprep.subr.mxu0 0.0
    %148 = vmatpush2.msra.mxu0 %v56
    %149 = vmatprep.subr.mxu0 0.0
    %150 = vmatpush2.msra.mxu0 %v55
    %151 = vmatprep.subr.mxu0 0.0
    %152 = vmatpush2.msra.mxu0 %v54
    %153 = vmatprep.subr.mxu0 0.0
    %154 = vmatpush2.msra.mxu0 %v53
    %155 = vmatprep.subr.mxu0 0.0
    %156 = vmatpush2.msra.mxu0 %v52
    %157 = vmatprep.subr.mxu0 0.0
    %158 = vmatpush2.msra.mxu0 %v51
    %159 = vmatprep.subr.mxu0 0.0
    %160 = vmatpush2.msra.mxu0 %v50
    %161 = vmatprep.subr.mxu0 0.0
    %162 = vmatpush2.msra.mxu0 %v49
    %163 = vmatprep.subr.mxu0 0.0
    %164 = vmatpush2.msra.mxu0 %v48
    %165 = vmatprep.subr.mxu0 0.0
    %166 = vmatpush2.msra.mxu0 %v47
    %167 = vmatprep.subr.mxu0 0.0
    %168 = vmatpush2.msra.mxu0 %v46
    %169 = vmatprep.subr.mxu0 0.0
    %170 = vmatpush2.msra.mxu0 %v45
    %171 = vmatprep.subr.mxu0 0.0
    %172 = vmatpush2.msra.mxu0 %v44
    %173 = vmatprep.mubr.f32.mxu0 %v101
    %174 = vmatmul.mubr.f32.gmra.mxu0 %v93
    %v175 = vpop.f32.mrf.mxu0
    %v176 = vadd.f32 %v83, %v175
    %v177 = vpop.f32.mrf.mxu0
    %178 = vdwg.mxu0
    %179 = vmatprep.subr.mxu0 0.0
    %180 = vmatpush1.msra.mxu0 %v75
    %181 = vmatprep.subr.mxu0 0.0
    %182 = vmatpush1.msra.mxu0 %v74
    %183 = vmatprep.subr.mxu0 0.0
    %184 = vmatpush1.msra.mxu0 %v73
    %185 = vmatprep.subr.mxu0 0.0
    %186 = vmatpush1.msra.mxu0 %v72
    %187 = vmatprep.subr.mxu0 0.0
    %188 = vmatpush1.msra.mxu0 %v71
    %189 = vmatprep.subr.mxu0 0.0
    %190 = vmatpush1.msra.mxu0 %v70
    %191 = vmatprep.subr.mxu0 0.0
    %192 = vmatpush1.msra.mxu0 %v69
    %193 = vmatprep.subr.mxu0 0.0
    %194 = vmatpush1.msra.mxu0 %v68
    %195 = vmatprep.subr.mxu0 0.0
    %196 = vmatpush1.msra.mxu0 %v67
    %197 = vmatprep.subr.mxu0 0.0
    %198 = vmatpush1.msra.mxu0 %v66
    %199 = vmatprep.subr.mxu0 0.0
    %200 = vmatpush1.msra.mxu0 %v65
    %201 = vmatprep.subr.mxu0 0.0
    %202 = vmatpush1.msra.mxu0 %v64
    %203 = vmatprep.subr.mxu0 0.0
    %204 = vmatpush1.msra.mxu0 %v63
    %205 = vmatprep.subr.mxu0 0.0
    %206 = vmatpush1.msra.mxu0 %v62
    %207 = vmatprep.subr.mxu0 0.0
    %208 = vmatpush1.msra.mxu0 %v61
    %209 = vmatprep.subr.mxu0 0.0
    %210 = vmatpush1.msra.mxu0 %v60
    %211 = vmatprep.subr.mxu0 0.0
    %212 = vmatpush2.msra.mxu0 0.0
    %213 = vmatprep.subr.mxu0 0.0
    %214 = vmatpush2.msra.mxu0 0.0
    %215 = vmatprep.subr.mxu0 0.0
    %216 = vmatpush2.msra.mxu0 0.0
    %217 = vmatprep.subr.mxu0 0.0
    %218 = vmatpush2.msra.mxu0 0.0
    %219 = vmatprep.subr.mxu0 0.0
    %220 = vmatpush2.msra.mxu0 0.0
    %221 = vmatprep.subr.mxu0 0.0
    %222 = vmatpush2.msra.mxu0 0.0
    %223 = vmatprep.subr.mxu0 0.0
    %224 = vmatpush2.msra.mxu0 0.0
    %225 = vmatprep.subr.mxu0 0.0
    %226 = vmatpush2.msra.mxu0 0.0
    %227 = vmatprep.subr.mxu0 0.0
    %228 = vmatpush2.msra.mxu0 0.0
    %229 = vmatprep.subr.mxu0 0.0
    %230 = vmatpush2.msra.mxu0 0.0
    %231 = vmatprep.subr.mxu0 0.0
    %232 = vmatpush2.msra.mxu0 0.0
    %233 = vmatprep.subr.mxu0 0.0
    %234 = vmatpush2.msra.mxu0 0.0
    %235 = vmatprep.subr.mxu0 0.0
    %236 = vmatpush2.msra.mxu0 0.0
    %237 = vmatprep.subr.mxu0 0.0
    %238 = vmatpush2.msra.mxu0 0.0
    %239 = vmatprep.subr.mxu0 0.0
    %240 = vmatpush2.msra.mxu0 %v77
    %241 = vmatprep.subr.mxu0 0.0
    %242 = vmatpush2.msra.mxu0 %v76
    %243 = vmatprep.mubr.f32.mxu0 %v107
    %244 = vmatmul.mubr.f32.gmra.mxu0 %v100
    %v245 = vpop.f32.mrf.mxu0
    %v246 = vadd.f32 %v176, %v245
    %v247 = vpop.f32.mrf.mxu0
    %248 = vdwg.mxu0
    %v249 = vmax.f32 %v246, 0.0
    %v250 = vld [vmem:[%s3] sm:$0xff]
    %v251 = vld [vmem:[%s3 + $0x8] sm:$0xff]
    %v252 = vld [vmem:[%s3 + $0x10] sm:$0xff]
    %v253 = vld [vmem:[%s3 + $0x18] sm:$0xff]
    %v254 = vld [vmem:[%s3 + $0x20] sm:$0xff]
    %v255 = vld [vmem:[%s3 + $0x28] sm:$0xff]
    %v256 = vld [vmem:[%s3 + $0x30] sm:$0xff]
    %v257 = vld [vmem:[%s3 + $0x38] sm:$0xff]
    %v258 = vld [vmem:[%s3 + $0x40] sm:$0xff]
    %v259 = vld [vmem:[%s3 + $0x48] sm:$0xff]
    %v260 = vld [vmem:[%s3 + $0x50] sm:$0xff]
    %v261 = vld [vmem:[%s3 + $0x58] sm:$0xff]
    %v262 = vld [vmem:[%s3 + $0x60] sm:$0xff]
    %v263 = vld [vmem:[%s3 + $0x68] sm:$0xff]
    %v264 = vld [vmem:[%s3 + $0x70] sm:$0xff]
    %v265 = vld [vmem:[%s3 + $0x78] sm:$0xff]
    %v266 = vld [vmem:[%s4] sm:$0x1]
    %v268 = vlaneseq
    %v269 = vshrl.u32 %v268, 7
    %v270 = vsub.s32 0, %v269
    %v271 = vrot.slane %v266, %v270
    %273 = vmatprep.subr.mxu0 0.0
    %274 = vmatpush1.msra.mxu0 %v265
    %275 = vmatprep.subr.mxu0 0.0
    %276 = vmatpush1.msra.mxu0 %v264
    %277 = vmatprep.subr.mxu0 0.0
    %278 = vmatpush1.msra.mxu0 %v263
    %279 = vmatprep.subr.mxu0 0.0
    %280 = vmatpush1.msra.mxu0 %v262
    %281 = vmatprep.subr.mxu0 0.0
    %282 = vmatpush1.msra.mxu0 %v261
    %283 = vmatprep.subr.mxu0 0.0
    %284 = vmatpush1.msra.mxu0 %v260
    %285 = vmatprep.subr.mxu0 0.0
    %286 = vmatpush1.msra.mxu0 %v259
    %287 = vmatprep.subr.mxu0 0.0
    %288 = vmatpush1.msra.mxu0 %v258
    %289 = vmatprep.subr.mxu0 0.0
    %290 = vmatpush1.msra.mxu0 %v257
    %291 = vmatprep.subr.mxu0 0.0
    %292 = vmatpush1.msra.mxu0 %v256
    %293 = vmatprep.subr.mxu0 0.0
    %294 = vmatpush1.msra.mxu0 %v255
    %295 = vmatprep.subr.mxu0 0.0
    %296 = vmatpush1.msra.mxu0 %v254
    %297 = vmatprep.subr.mxu0 0.0
    %298 = vmatpush1.msra.mxu0 %v253
    %299 = vmatprep.subr.mxu0 0.0
    %300 = vmatpush1.msra.mxu0 %v252
    %301 = vmatprep.subr.mxu0 0.0
    %302 = vmatpush1.msra.mxu0 %v251
    %303 = vmatprep.subr.mxu0 0.0
    %304 = vmatpush1.msra.mxu0 %v250
    %305 = vmatprep.subr.mxu0 0.0
    %306 = vmatpush2.msra.mxu0 0.0
    %307 = vmatprep.subr.mxu0 0.0
    %308 = vmatpush2.msra.mxu0 0.0
    %309 = vmatprep.subr.mxu0 0.0
    %310 = vmatpush2.msra.mxu0 0.0
    %311 = vmatprep.subr.mxu0 0.0
    %312 = vmatpush2.msra.mxu0 0.0
    %313 = vmatprep.subr.mxu0 0.0
    %314 = vmatpush2.msra.mxu0 0.0
    %315 = vmatprep.subr.mxu0 0.0
    %316 = vmatpush2.msra.mxu0 0.0
    %317 = vmatprep.subr.mxu0 0.0
    %318 = vmatpush2.msra.mxu0 0.0
    %319 = vmatprep.subr.mxu0 0.0
    %320 = vmatpush2.msra.mxu0 0.0
    %321 = vmatprep.subr.mxu0 0.0
    %322 = vmatpush2.msra.mxu0 0.0
    %323 = vmatprep.subr.mxu0 0.0
    %324 = vmatpush2.msra.mxu0 0.0
    %325 = vmatprep.subr.mxu0 0.0
    %326 = vmatpush2.msra.mxu0 0.0
    %327 = vmatprep.subr.mxu0 0.0
    %328 = vmatpush2.msra.mxu0 0.0
    %329 = vmatprep.subr.mxu0 0.0
    %330 = vmatpush2.msra.mxu0 0.0
    %331 = vmatprep.subr.mxu0 0.0
    %332 = vmatpush2.msra.mxu0 0.0
    %333 = vmatprep.subr.mxu0 0.0
    %334 = vmatpush2.msra.mxu0 0.0
    %335 = vmatprep.subr.mxu0 0.0
    %336 = vmatpush2.msra.mxu0 0.0
    %337 = vmatprep.mubr.f32.mxu0 0.0
    %338 = vmatmul.mubr.f32.gmra.mxu0 %v249
    %v339 = vpop.f32.mrf.mxu0
    %v340 = vadd.f32 %v271, %v339
    %v341 = vpop.f32.mrf.mxu0
    %342 = vdwg.mxu0
    %v343 = vmax.f32 %v340, 0.0
    %v344 = vld [vmem:[%s5] sm:$0xff]
    %v345 = vld [vmem:[%s5 + $0x8] sm:$0xff]
    %v346 = vld [vmem:[%s5 + $0x10] sm:$0xff]
    %v347 = vld [vmem:[%s5 + $0x18] sm:$0xff]
    %v348 = vld [vmem:[%s5 + $0x20] sm:$0xff]
    %v349 = vld [vmem:[%s5 + $0x28] sm:$0xff]
    %v350 = vld [vmem:[%s5 + $0x30] sm:$0xff]
    %v351 = vld [vmem:[%s5 + $0x38] sm:$0xff]
    %v352 = vld [vmem:[%s5 + $0x40] sm:$0xff]
    %v353 = vld [vmem:[%s5 + $0x48] sm:$0xff]
    %v354 = vld [vmem:[%s5 + $0x50] sm:$0xff]
    %v355 = vld [vmem:[%s5 + $0x58] sm:$0xff]
    %v356 = vld [vmem:[%s5 + $0x60] sm:$0xff]
    %v357 = vld [vmem:[%s5 + $0x68] sm:$0xff]
    %v358 = vld [vmem:[%s5 + $0x70] sm:$0xff]
    %v359 = vld [vmem:[%s5 + $0x78] sm:$0xff]
    %v360 = vld [vmem:[%s6] sm:$0x1]
    %v362 = vlaneseq
    %v363 = vshrl.u32 %v362, 7
    %v364 = vsub.s32 0, %v363
    %v365 = vrot.slane %v360, %v364
    %367 = vmatprep.subr.mxu0 0.0
    %368 = vmatpush1.msra.mxu0 %v359
    %369 = vmatprep.subr.mxu0 0.0
    %370 = vmatpush1.msra.mxu0 %v358
    %371 = vmatprep.subr.mxu0 0.0
    %372 = vmatpush1.msra.mxu0 %v357
    %373 = vmatprep.subr.mxu0 0.0
    %374 = vmatpush1.msra.mxu0 %v356
    %375 = vmatprep.subr.mxu0 0.0
    %376 = vmatpush1.msra.mxu0 %v355
    %377 = vmatprep.subr.mxu0 0.0
    %378 = vmatpush1.msra.mxu0 %v354
    %379 = vmatprep.subr.mxu0 0.0
    %380 = vmatpush1.msra.mxu0 %v353
    %381 = vmatprep.subr.mxu0 0.0
    %382 = vmatpush1.msra.mxu0 %v352
    %383 = vmatprep.subr.mxu0 0.0
    %384 = vmatpush1.msra.mxu0 %v351
    %385 = vmatprep.subr.mxu0 0.0
    %386 = vmatpush1.msra.mxu0 %v350
    %387 = vmatprep.subr.mxu0 0.0
    %388 = vmatpush1.msra.mxu0 %v349
    %389 = vmatprep.subr.mxu0 0.0
    %390 = vmatpush1.msra.mxu0 %v348
    %391 = vmatprep.subr.mxu0 0.0
    %392 = vmatpush1.msra.mxu0 %v347
    %393 = vmatprep.subr.mxu0 0.0
    %394 = vmatpush1.msra.mxu0 %v346
    %395 = vmatprep.subr.mxu0 0.0
    %396 = vmatpush1.msra.mxu0 %v345
    %397 = vmatprep.subr.mxu0 0.0
    %398 = vmatpush1.msra.mxu0 %v344
    %399 = vmatprep.subr.mxu0 0.0
    %400 = vmatpush2.msra.mxu0 0.0
    %401 = vmatprep.subr.mxu0 0.0
    %402 = vmatpush2.msra.mxu0 0.0
    %403 = vmatprep.subr.mxu0 0.0
    %404 = vmatpush2.msra.mxu0 0.0
    %405 = vmatprep.subr.mxu0 0.0
    %406 = vmatpush2.msra.mxu0 0.0
    %407 = vmatprep.subr.mxu0 0.0
    %408 = vmatpush2.msra.mxu0 0.0
    %409 = vmatprep.subr.mxu0 0.0
    %410 = vmatpush2.msra.mxu0 0.0
    %411 = vmatprep.subr.mxu0 0.0
    %412 = vmatpush2.msra.mxu0 0.0
    %413 = vmatprep.subr.mxu0 0.0
    %414 = vmatpush2.msra.mxu0 0.0
    %415 = vmatprep.subr.mxu0 0.0
    %416 = vmatpush2.msra.mxu0 0.0
    %417 = vmatprep.subr.mxu0 0.0
    %418 = vmatpush2.msra.mxu0 0.0
    %419 = vmatprep.subr.mxu0 0.0
    %420 = vmatpush2.msra.mxu0 0.0
    %421 = vmatprep.subr.mxu0 0.0
    %422 = vmatpush2.msra.mxu0 0.0
    %423 = vmatprep.subr.mxu0 0.0
    %424 = vmatpush2.msra.mxu0 0.0
    %425 = vmatprep.subr.mxu0 0.0
    %426 = vmatpush2.msra.mxu0 0.0
    %427 = vmatprep.subr.mxu0 0.0
    %428 = vmatpush2.msra.mxu0 0.0
    %429 = vmatprep.subr.mxu0 0.0
    %430 = vmatpush2.msra.mxu0 0.0
    %431 = vmatprep.mubr.f32.mxu0 0.0
    %432 = vmatmul.mubr.f32.gmra.mxu0 %v343
    %v433 = vpop.f32.mrf.mxu0
    %v434 = vadd.f32 %v365, %v433
    %v435 = vpop.f32.mrf.mxu0
    %436 = vdwg.mxu0
    %437 = vst [vmem:[#allocation2] sm:$0x3] %v434
    // Predicated region
    $region30: #{net_forward.5} parent=1 // pred_check
      _
    $region31: #{net_forward.5} parent=1 // pred_check_branch
      %439 = sbr.rel (0) target = $region33
    $region32: #{net_forward.5} parent=1 // pred_region
      %s441 = ssub.s32 32, 32
      %442 = vsyncadd [#allocation3], %s441
      %s444 = sshll.u32 [#allocation2], 4
      %s445 = int_to_ptr.vmem [resolvable:$true] %s444
      %447 = dma.vmem_to_hbm [thread:$0]  %s445, 32, %s7, [#allocation3]
    $region33: #{net_forward.5} parent=1 // pred_fallthru
      _
    // Predicated region
    $region34: #{net_forward.5} parent=1 // pred_check
      _
    $region35: #{net_forward.5} parent=1 // pred_check_branch
      %449 = sbr.rel (0) target = $region37
    $region36: #{net_forward.5} parent=1 // pred_region
      %450 = dma.done [#allocation3], 32
    $region37: #{net_forward.5} parent=1 // pred_fallthru
      _
    %451 = vsyncpa [#allocation3], 1

</llo_original>
